<compile_context>
chip_gen: v5e
topology: v5e:2x2
jax: 0.10.0
libtpu: 0.0.40
codegen_flags: <defaults>
</compile_context>

<pallas_src>
import jax
import jax.numpy as jnp
from jax.experimental import pallas as pl
from jax.experimental.pallas import tpu as pltpu


def basic_block_kernel(x_ref, w1_ref, w2_ref, s1_ref, b1_ref, s2_ref, b2_ref,
                       out_ref, lhs_ref):
    # x_ref  : (TB, H, WC)    bf16  TB images, (W, C) flattened into lanes
    # w*_ref : (3*WC, WC)     bf16  fused block-banded conv weights (K = dy*WC)
    # s*/b*  : (1, WC)        f32   folded BN scale / bias (tiled per pixel)
    # out_ref: (TB, H, WC)    bf16
    # lhs_ref: (TB, H, 3*WC)  bf16  VMEM scratch: im2row over the 3 vertical taps
    TB, H, WC = x_ref.shape
    M = TB * H

    def stage(img):
        """Build the im2row LHS: lane block dy holds input row (h - 1 + dy)."""
        zrow = jnp.zeros((TB, 1, WC), lhs_ref.dtype)
        # dy = 0 tap reads row h-1: shift down, zero the top halo row.
        # (The 1-row-offset sublane slices are misaligned; accepted -- the cost
        #  is small next to the two K = 3*WC matmuls.)
        lhs_ref[:, 0:1, 0:WC] = zrow
        lhs_ref[:, 1:H, 0:WC] = img[:, 0:H - 1, :]
        # dy = 1 tap reads row h: centre block (lane offset WC, 128-aligned).
        lhs_ref[:, :, WC:2 * WC] = img
        # dy = 2 tap reads row h+1: shift up, zero the bottom halo row.
        lhs_ref[:, 0:H - 1, 2 * WC:3 * WC] = img[:, 1:H, :]
        lhs_ref[:, H - 1:H, 2 * WC:3 * WC] = zrow

    x = x_ref[...]

    # ---- conv1: ONE (M, 3*WC) @ (3*WC, WC) bf16 matmul, f32 accumulation ----
    stage(x)
    acc = jnp.dot(lhs_ref[...].reshape(M, 3 * WC), w1_ref[...],
                  preferred_element_type=jnp.float32)

    # ---- bn1 + relu (f32), restage as bf16 for conv2 ------------------------
    y1 = jnp.maximum(acc * s1_ref[...] + b1_ref[...], 0.0)
    stage(y1.astype(lhs_ref.dtype).reshape(TB, H, WC))

    # ---- conv2 ---------------------------------------------------------------
    acc2 = jnp.dot(lhs_ref[...].reshape(M, 3 * WC), w2_ref[...],
                   preferred_element_type=jnp.float32)

    # ---- bn2 + residual + relu (f32), lane-dense bf16 store ------------------
    identity = x.reshape(M, WC).astype(jnp.float32)
    out = jnp.maximum(acc2 * s2_ref[...] + b2_ref[...] + identity, 0.0)
    out_ref[...] = out.astype(out_ref.dtype).reshape(TB, H, WC)


def _banded_conv_weights(w_oihw, width):
    """OIHW 3x3 conv weight -> (3*W*Cin, W*Cout) fused block-banded matrix.

    band[dy*W*Cin + iw*Cin + ci, ow*Cout + co] = w[co, ci, dy, iw - ow + 1]
    when 0 <= iw - ow + 1 < 3, else 0.  Multiplying the im2row row
    concat(x[h-1], x[h], x[h+1]) (each (W*Cin,), out-of-image rows zero) by
    this matrix applies the full zero-padded 3x3 conv for output row h.
    """
    cout, cin, kh, kw = w_oihw.shape
    assert kh == 3 and kw == 3
    wt = jnp.transpose(w_oihw, (2, 3, 1, 0))            # (dy, dx, ci, co)
    iw = jnp.arange(width)[:, None]                     # input pixel index
    ow = jnp.arange(width)[None, :]                     # output pixel index
    dx = iw - ow + 1                                    # (W, W)
    valid = (dx >= 0) & (dx < 3)
    taps = wt[:, jnp.clip(dx, 0, 2)]                    # (3, W, W, ci, co)
    band = jnp.where(valid[None, :, :, None, None], taps, 0.0)
    band = jnp.transpose(band, (0, 1, 3, 2, 4))         # (3, W, ci, W, co)
    return band.reshape(3 * width * cin, width * cout)


def fold_basic_block_params(w1, w2, s1, b1, s2, b2, width):
    """Precompute kernel-side operands (do once per block, reuse across calls)."""
    cout = w1.shape[0]
    wc = width * cout
    w1_f = _banded_conv_weights(w1, width).astype(jnp.bfloat16)
    w2_f = _banded_conv_weights(w2, width).astype(jnp.bfloat16)
    s1_t = jnp.tile(s1, width).reshape(1, wc).astype(jnp.float32)
    b1_t = jnp.tile(b1, width).reshape(1, wc).astype(jnp.float32)
    s2_t = jnp.tile(s2, width).reshape(1, wc).astype(jnp.float32)
    b2_t = jnp.tile(b2, width).reshape(1, wc).astype(jnp.float32)
    return w1_f, w2_f, s1_t, b1_t, s2_t, b2_t


def _pick_block_batch(n_images, height, target_m):
    """Images per grid step: fill the MXU M dim (~256 on v6e/v7x, pass
    target_m=128 on v5e to avoid f32-accumulator vreg pressure) while keeping
    the grid length >= 2 (megacore / two v7x TCs) and dividing N exactly."""
    tb = max(1, min(n_images, target_m // height))
    if n_images >= 2:
        tb = min(tb, n_images // 2)
    while n_images % tb:
        tb -= 1
    return tb


def basic_block_pallas_flat(x_flat, w1_f, w2_f, s1_t, b1_t, s2_t, b2_t,
                            *, target_m=256):
    """Lane-dense entry point: x_flat (N, H, W*C) bf16 -> (N, H, W*C) bf16."""
    N, H, WC = x_flat.shape
    K = 3 * WC
    tb = _pick_block_batch(N, H, target_m)

    flops = 2 * 2 * (N * H) * K * WC                      # two fused-conv matmuls
    bytes_accessed = (2 * N * H * WC * 2                  # bf16 in + out
                      + 2 * K * WC * 2                    # two fused band weights
                      + 4 * WC * 4)                       # f32 scale / bias

    return pl.pallas_call(
        basic_block_kernel,
        out_shape=jax.ShapeDtypeStruct((N, H, WC), jnp.bfloat16),
        grid_spec=pltpu.PrefetchScalarGridSpec(
            num_scalar_prefetch=0,
            grid=(N // tb,),
            in_specs=[
                pl.BlockSpec((tb, H, WC), lambda n: (n, 0, 0)),
                pl.BlockSpec((K, WC), lambda n: (0, 0)),
                pl.BlockSpec((K, WC), lambda n: (0, 0)),
                pl.BlockSpec((1, WC), lambda n: (0, 0)),
                pl.BlockSpec((1, WC), lambda n: (0, 0)),
                pl.BlockSpec((1, WC), lambda n: (0, 0)),
                pl.BlockSpec((1, WC), lambda n: (0, 0)),
            ],
            out_specs=pl.BlockSpec((tb, H, WC), lambda n: (n, 0, 0)),
            scratch_shapes=[pltpu.VMEM((tb, H, 3 * WC), jnp.bfloat16)],
        ),
        compiler_params=pltpu.CompilerParams(
            dimension_semantics=("parallel",)),
        cost_estimate=pl.CostEstimate(flops=flops, transcendentals=0,
                                      bytes_accessed=bytes_accessed),
    )(x_flat, w1_f, w2_f, s1_t, b1_t, s2_t, b2_t)


def basic_block_pallas_nchw(x_nchw, w1, w2, s1, b1, s2, b2):
    """NCHW f32 adapter, used only to check against the PyTorch reference.
    Chained blocks should stay in the lane-dense bf16 layout and call
    `basic_block_pallas_flat` directly to avoid these HBM relayout passes."""
    N, Cin, H, W = x_nchw.shape
    Cout = w1.shape[0]
    assert Cin == Cout, "identity path requires inplanes == planes"
    params = fold_basic_block_params(w1, w2, s1, b1, s2, b2, W)
    # NOTE: the residual uses the bf16-rounded input (inherent to the bf16
    # lane-dense activation contract); pass an f32 copy separately if tighter
    # skip-connection accuracy is ever required.
    x_flat = jnp.transpose(x_nchw, (0, 2, 3, 1)).reshape(N, H, W * Cin)
    out_flat = basic_block_pallas_flat(x_flat.astype(jnp.bfloat16), *params)
    out = out_flat.astype(jnp.float32).reshape(N, H, W, Cout)
    return jnp.transpose(out, (0, 3, 1, 2))


def reference_basic_block(x, w1, w2, s1, b1, s2, b2):
    """Pure-JAX f32 reference (NCHW) for correctness checking."""
    conv = lambda a, w: jax.lax.conv_general_dilated(
        a, w, window_strides=(1, 1), padding=((1, 1), (1, 1)),
        dimension_numbers=("NCHW", "OIHW", "NCHW"))
    out = conv(x, w1)
    out = out * s1[None, :, None, None] + b1[None, :, None, None]
    out = jnp.maximum(out, 0.0)
    out = conv(out, w2)
    out = out * s2[None, :, None, None] + b2[None, :, None, None]
    return jnp.maximum(out + x, 0.0)


if __name__ == "__main__":
    N, C, H, W = 8, 16, 16, 16   # inplanes = planes = 16, stride = 1
    key = jax.random.PRNGKey(0)
    kx, kw1, kw2, kg1, kb1, kg2, kb2, km1, kv1, km2, kv2 = jax.random.split(key, 11)

    x = jax.random.normal(kx, (N, C, H, W), jnp.float32)

    # conv weights (PyTorch OIHW: (Cout, Cin, 3, 3)), bias=False
    w1 = jax.random.normal(kw1, (C, C, 3, 3), jnp.float32) * 0.1
    w2 = jax.random.normal(kw2, (C, C, 3, 3), jnp.float32) * 0.1

    # deterministic BatchNorm2d (eval-mode) parameters, folded to scale/bias
    eps = 1e-5
    gamma1 = 1.0 + 0.1 * jax.random.normal(kg1, (C,), jnp.float32)
    beta1 = 0.1 * jax.random.normal(kb1, (C,), jnp.float32)
    rmean1 = 0.05 * jax.random.normal(km1, (C,), jnp.float32)
    rvar1 = 1.0 + 0.1 * jnp.abs(jax.random.normal(kv1, (C,), jnp.float32))
    gamma2 = 1.0 + 0.1 * jax.random.normal(kg2, (C,), jnp.float32)
    beta2 = 0.1 * jax.random.normal(kb2, (C,), jnp.float32)
    rmean2 = 0.05 * jax.random.normal(km2, (C,), jnp.float32)
    rvar2 = 1.0 + 0.1 * jnp.abs(jax.random.normal(kv2, (C,), jnp.float32))

    s1 = gamma1 / jnp.sqrt(rvar1 + eps)
    b1 = beta1 - rmean1 * s1
    s2 = gamma2 / jnp.sqrt(rvar2 + eps)
    b2 = beta2 - rmean2 * s2

    out = basic_block_pallas_nchw(x, w1, w2, s1, b1, s2, b2)
    out = jax.block_until_ready(out)

    ref = reference_basic_block(x, w1, w2, s1, b1, s2, b2)
    assert out.shape == (N, C, H, W)
    # bf16 activations/weights on the MXU and a bf16 output -> compare to the
    # f32 reference with a bf16-level tolerance (f32 accumulation keeps the
    # error small).
    max_err = float(jnp.max(jnp.abs(out - ref)))
    assert jnp.allclose(out, ref, atol=1.5e-1, rtol=5e-2), f"max abs err {max_err}"

    print("KERNEL_OK")
</pallas_src>

<mosaic_0001>
module attributes {stable_mosaic.version = 11 : i64} {
  func.func @basic_block_kernel(%arg0: i32, %arg1: memref<4x16x256xbf16, #tpu.memory_space<vmem>>, %arg2: memref<768x256xbf16, #tpu.memory_space<vmem>>, %arg3: memref<768x256xbf16, #tpu.memory_space<vmem>>, %arg4: memref<1x256xf32, #tpu.memory_space<vmem>>, %arg5: memref<1x256xf32, #tpu.memory_space<vmem>>, %arg6: memref<1x256xf32, #tpu.memory_space<vmem>>, %arg7: memref<1x256xf32, #tpu.memory_space<vmem>>, %arg8: memref<4x16x256xbf16, #tpu.memory_space<vmem>>, %arg9: memref<4x16x768xbf16, #tpu.memory_space<vmem>>) attributes {dimension_semantics = [#tpu.dimension_semantics<parallel>], iteration_bounds = array<i64: 2>, scalar_prefetch = 0 : i64, scratch_operands = 1 : i64, tpu.core_type = #tpu.core_type<tc>, window_params = [{transform_indices = @transform_0, window_bounds = array<i64: 4, 16, 256>}, {pipeline_mode = #tpu.pipeline_mode<synchronous>, transform_indices = @transform_1, window_bounds = array<i64: 768, 256>}, {pipeline_mode = #tpu.pipeline_mode<synchronous>, transform_indices = @transform_2, window_bounds = array<i64: 768, 256>}, {pipeline_mode = #tpu.pipeline_mode<synchronous>, transform_indices = @transform_3, window_bounds = array<i64: 1, 256>}, {pipeline_mode = #tpu.pipeline_mode<synchronous>, transform_indices = @transform_4, window_bounds = array<i64: 1, 256>}, {pipeline_mode = #tpu.pipeline_mode<synchronous>, transform_indices = @transform_5, window_bounds = array<i64: 1, 256>}, {pipeline_mode = #tpu.pipeline_mode<synchronous>, transform_indices = @transform_6, window_bounds = array<i64: 1, 256>}, {transform_indices = @transform_7, window_bounds = array<i64: 4, 16, 256>}]} {
    %c0 = arith.constant 0 : index
    %c0_0 = arith.constant 0 : index
    %c0_1 = arith.constant 0 : index
    %0 = vector.load %arg1[%c0, %c0_0, %c0_1] : memref<4x16x256xbf16, #tpu.memory_space<vmem>>, vector<4x16x256xbf16>
    %cst = arith.constant 0.000000e+00 : bf16
    %1 = vector.broadcast %cst : bf16 to vector<4x1x256xbf16>
    %c0_2 = arith.constant 0 : index
    %c0_3 = arith.constant 0 : index
    %c0_4 = arith.constant 0 : index
    %2 = vector.load %arg9[%c0_2, %c0_3, %c0_4] : memref<4x16x768xbf16, #tpu.memory_space<vmem>>, vector<4x1x256xbf16>
    tpu.vector_store %arg9[%c0_2, %c0_3, %c0_4], %1 {strides = array<i32>} : memref<4x16x768xbf16, #tpu.memory_space<vmem>>, vector<4x1x256xbf16>,
    %3 = vector.extract_strided_slice %0 {offsets = [0, 0, 0], sizes = [4, 15, 256], strides = [1, 1, 1]} : vector<4x16x256xbf16> to vector<4x15x256xbf16>
    %c0_5 = arith.constant 0 : index
    %c1 = arith.constant 1 : index
    %c0_6 = arith.constant 0 : index
    %4 = vector.load %arg9[%c0_5, %c1, %c0_6] : memref<4x16x768xbf16, #tpu.memory_space<vmem>>, vector<4x15x256xbf16>
    tpu.vector_store %arg9[%c0_5, %c1, %c0_6], %3 {strides = array<i32>} : memref<4x16x768xbf16, #tpu.memory_space<vmem>>, vector<4x15x256xbf16>,
    %c0_7 = arith.constant 0 : index
    %c0_8 = arith.constant 0 : index
    %c256 = arith.constant 256 : index
    %5 = vector.load %arg9[%c0_7, %c0_8, %c256] : memref<4x16x768xbf16, #tpu.memory_space<vmem>>, vector<4x16x256xbf16>
    tpu.vector_store %arg9[%c0_7, %c0_8, %c256], %0 {strides = array<i32>} : memref<4x16x768xbf16, #tpu.memory_space<vmem>>, vector<4x16x256xbf16>,
    %6 = vector.extract_strided_slice %0 {offsets = [0, 1, 0], sizes = [4, 15, 256], strides = [1, 1, 1]} : vector<4x16x256xbf16> to vector<4x15x256xbf16>
    %c0_9 = arith.constant 0 : index
    %c0_10 = arith.constant 0 : index
    %c512 = arith.constant 512 : index
    %7 = vector.load %arg9[%c0_9, %c0_10, %c512] : memref<4x16x768xbf16, #tpu.memory_space<vmem>>, vector<4x15x256xbf16>
    tpu.vector_store %arg9[%c0_9, %c0_10, %c512], %6 {strides = array<i32>} : memref<4x16x768xbf16, #tpu.memory_space<vmem>>, vector<4x15x256xbf16>,
    %c0_11 = arith.constant 0 : index
    %c15 = arith.constant 15 : index
    %c512_12 = arith.constant 512 : index
    %8 = vector.load %arg9[%c0_11, %c15, %c512_12] : memref<4x16x768xbf16, #tpu.memory_space<vmem>>, vector<4x1x256xbf16>
    tpu.vector_store %arg9[%c0_11, %c15, %c512_12], %1 {strides = array<i32>} : memref<4x16x768xbf16, #tpu.memory_space<vmem>>, vector<4x1x256xbf16>,
    %c0_13 = arith.constant 0 : index
    %c0_14 = arith.constant 0 : index
    %c0_15 = arith.constant 0 : index
    %9 = vector.load %arg9[%c0_13, %c0_14, %c0_15] : memref<4x16x768xbf16, #tpu.memory_space<vmem>>, vector<4x16x768xbf16>
    %10 = vector.shape_cast %9 : vector<4x16x768xbf16> to vector<64x768xbf16>
    %c0_16 = arith.constant 0 : index
    %c0_17 = arith.constant 0 : index
    %11 = vector.load %arg2[%c0_16, %c0_17] : memref<768x256xbf16, #tpu.memory_space<vmem>>, vector<768x256xbf16>
    %cst_18 = arith.constant dense<0.000000e+00> : vector<64x256xf32>
    %12 = tpu.matmul %10, %11, %cst_18 {dimension_numbers = #tpu.dot_dimension_numbers<[1], [0], [0], [1], [0, 0, 1, 1], [], []>} : vector<64x768xbf16>, vector<768x256xbf16>, vector<64x256xf32> -> vector<64x256xf32>
    %c0_19 = arith.constant 0 : index
    %c0_20 = arith.constant 0 : index
    %13 = vector.load %arg4[%c0_19, %c0_20] : memref<1x256xf32, #tpu.memory_space<vmem>>, vector<1x256xf32>
    %14 = vector.broadcast %13 : vector<1x256xf32> to vector<64x256xf32>
    %15 = arith.mulf %12, %14 : vector<64x256xf32>
    %c0_21 = arith.constant 0 : index
    %c0_22 = arith.constant 0 : index
    %16 = vector.load %arg5[%c0_21, %c0_22] : memref<1x256xf32, #tpu.memory_space<vmem>>, vector<1x256xf32>
    %17 = vector.broadcast %16 : vector<1x256xf32> to vector<64x256xf32>
    %18 = arith.addf %15, %17 : vector<64x256xf32>
    %cst_23 = arith.constant 0.000000e+00 : f32
    %19 = vector.broadcast %cst_23 : f32 to vector<64x256xf32>
    %20 = arith.maximumf %18, %19 : vector<64x256xf32>
    %21 = arith.truncf %20 : vector<64x256xf32> to vector<64x256xbf16>
    %22 = vector.shape_cast %21 : vector<64x256xbf16> to vector<4x16x256xbf16>
    %cst_24 = arith.constant 0.000000e+00 : bf16
    %23 = vector.broadcast %cst_24 : bf16 to vector<4x1x256xbf16>
    %c0_25 = arith.constant 0 : index
    %c0_26 = arith.constant 0 : index
    %c0_27 = arith.constant 0 : index
    %24 = vector.load %arg9[%c0_25, %c0_26, %c0_27] : memref<4x16x768xbf16, #tpu.memory_space<vmem>>, vector<4x1x256xbf16>
    tpu.vector_store %arg9[%c0_25, %c0_26, %c0_27], %23 {strides = array<i32>} : memref<4x16x768xbf16, #tpu.memory_space<vmem>>, vector<4x1x256xbf16>,
    %25 = vector.extract_strided_slice %22 {offsets = [0, 0, 0], sizes = [4, 15, 256], strides = [1, 1, 1]} : vector<4x16x256xbf16> to vector<4x15x256xbf16>
    %c0_28 = arith.constant 0 : index
    %c1_29 = arith.constant 1 : index
    %c0_30 = arith.constant 0 : index
    %26 = vector.load %arg9[%c0_28, %c1_29, %c0_30] : memref<4x16x768xbf16, #tpu.memory_space<vmem>>, vector<4x15x256xbf16>
    tpu.vector_store %arg9[%c0_28, %c1_29, %c0_30], %25 {strides = array<i32>} : memref<4x16x768xbf16, #tpu.memory_space<vmem>>, vector<4x15x256xbf16>,
    %c0_31 = arith.constant 0 : index
    %c0_32 = arith.constant 0 : index
    %c256_33 = arith.constant 256 : index
    %27 = vector.load %arg9[%c0_31, %c0_32, %c256_33] : memref<4x16x768xbf16, #tpu.memory_space<vmem>>, vector<4x16x256xbf16>
    tpu.vector_store %arg9[%c0_31, %c0_32, %c256_33], %22 {strides = array<i32>} : memref<4x16x768xbf16, #tpu.memory_space<vmem>>, vector<4x16x256xbf16>,
    %28 = vector.extract_strided_slice %22 {offsets = [0, 1, 0], sizes = [4, 15, 256], strides = [1, 1, 1]} : vector<4x16x256xbf16> to vector<4x15x256xbf16>
    %c0_34 = arith.constant 0 : index
    %c0_35 = arith.constant 0 : index
    %c512_36 = arith.constant 512 : index
    %29 = vector.load %arg9[%c0_34, %c0_35, %c512_36] : memref<4x16x768xbf16, #tpu.memory_space<vmem>>, vector<4x15x256xbf16>
    tpu.vector_store %arg9[%c0_34, %c0_35, %c512_36], %28 {strides = array<i32>} : memref<4x16x768xbf16, #tpu.memory_space<vmem>>, vector<4x15x256xbf16>,
    %c0_37 = arith.constant 0 : index
    %c15_38 = arith.constant 15 : index
    %c512_39 = arith.constant 512 : index
    %30 = vector.load %arg9[%c0_37, %c15_38, %c512_39] : memref<4x16x768xbf16, #tpu.memory_space<vmem>>, vector<4x1x256xbf16>
    tpu.vector_store %arg9[%c0_37, %c15_38, %c512_39], %23 {strides = array<i32>} : memref<4x16x768xbf16, #tpu.memory_space<vmem>>, vector<4x1x256xbf16>,
    %c0_40 = arith.constant 0 : index
    %c0_41 = arith.constant 0 : index
    %c0_42 = arith.constant 0 : index
    %31 = vector.load %arg9[%c0_40, %c0_41, %c0_42] : memref<4x16x768xbf16, #tpu.memory_space<vmem>>, vector<4x16x768xbf16>
    %32 = vector.shape_cast %31 : vector<4x16x768xbf16> to vector<64x768xbf16>
    %c0_43 = arith.constant 0 : index
    %c0_44 = arith.constant 0 : index
    %33 = vector.load %arg3[%c0_43, %c0_44] : memref<768x256xbf16, #tpu.memory_space<vmem>>, vector<768x256xbf16>
    %cst_45 = arith.constant dense<0.000000e+00> : vector<64x256xf32>
    %34 = tpu.matmul %32, %33, %cst_45 {dimension_numbers = #tpu.dot_dimension_numbers<[1], [0], [0], [1], [0, 0, 1, 1], [], []>} : vector<64x768xbf16>, vector<768x256xbf16>, vector<64x256xf32> -> vector<64x256xf32>
    %35 = vector.shape_cast %0 : vector<4x16x256xbf16> to vector<64x256xbf16>
    %36 = arith.extf %35 : vector<64x256xbf16> to vector<64x256xf32>
    %c0_46 = arith.constant 0 : index
    %c0_47 = arith.constant 0 : index
    %37 = vector.load %arg6[%c0_46, %c0_47] : memref<1x256xf32, #tpu.memory_space<vmem>>, vector<1x256xf32>
    %38 = vector.broadcast %37 : vector<1x256xf32> to vector<64x256xf32>
    %39 = arith.mulf %34, %38 : vector<64x256xf32>
    %c0_48 = arith.constant 0 : index
    %c0_49 = arith.constant 0 : index
    %40 = vector.load %arg7[%c0_48, %c0_49] : memref<1x256xf32, #tpu.memory_space<vmem>>, vector<1x256xf32>
    %41 = vector.broadcast %40 : vector<1x256xf32> to vector<64x256xf32>
    %42 = arith.addf %39, %41 : vector<64x256xf32>
    %43 = arith.addf %42, %36 : vector<64x256xf32>
    %cst_50 = arith.constant 0.000000e+00 : f32
    %44 = vector.broadcast %cst_50 : f32 to vector<64x256xf32>
    %45 = arith.maximumf %43, %44 : vector<64x256xf32>
    %46 = arith.truncf %45 : vector<64x256xf32> to vector<64x256xbf16>
    %47 = vector.shape_cast %46 : vector<64x256xbf16> to vector<4x16x256xbf16>
    %c0_51 = arith.constant 0 : index
    %c0_52 = arith.constant 0 : index
    %c0_53 = arith.constant 0 : index
    %48 = vector.load %arg8[%c0_51, %c0_52, %c0_53] : memref<4x16x256xbf16, #tpu.memory_space<vmem>>, vector<4x16x256xbf16>
    tpu.vector_store %arg8[%c0_51, %c0_52, %c0_53], %47 {strides = array<i32>} : memref<4x16x256xbf16, #tpu.memory_space<vmem>>, vector<4x16x256xbf16>,
    return
  }
  func.func @transform_0(%arg0: i32) -> (i32, i32, i32) {
    %c0_i32 = arith.constant 0 : i32
    %c0_i32_0 = arith.constant 0 : i32
    %c0_i32_1 = arith.constant 0 : i32
    return %arg0, %c0_i32, %c0_i32_0 : i32, i32, i32
  }
  func.func @transform_1(%arg0: i32) -> (i32, i32) {
    %c0_i32 = arith.constant 0 : i32
    %c0_i32_0 = arith.constant 0 : i32
    %c0_i32_1 = arith.constant 0 : i32
    return %c0_i32, %c0_i32_0 : i32, i32
  }
  func.func @transform_2(%arg0: i32) -> (i32, i32) {
    %c0_i32 = arith.constant 0 : i32
    %c0_i32_0 = arith.constant 0 : i32
    %c0_i32_1 = arith.constant 0 : i32
    return %c0_i32, %c0_i32_0 : i32, i32
  }
  func.func @transform_3(%arg0: i32) -> (i32, i32) {
    %c0_i32 = arith.constant 0 : i32
    %c0_i32_0 = arith.constant 0 : i32
    %c0_i32_1 = arith.constant 0 : i32
    return %c0_i32, %c0_i32_0 : i32, i32
  }
  func.func @transform_4(%arg0: i32) -> (i32, i32) {
    %c0_i32 = arith.constant 0 : i32
    %c0_i32_0 = arith.constant 0 : i32
    %c0_i32_1 = arith.constant 0 : i32
    return %c0_i32, %c0_i32_0 : i32, i32
  }
  func.func @transform_5(%arg0: i32) -> (i32, i32) {
    %c0_i32 = arith.constant 0 : i32
    %c0_i32_0 = arith.constant 0 : i32
    %c0_i32_1 = arith.constant 0 : i32
    return %c0_i32, %c0_i32_0 : i32, i32
  }
  func.func @transform_6(%arg0: i32) -> (i32, i32) {
    %c0_i32 = arith.constant 0 : i32
    %c0_i32_0 = arith.constant 0 : i32
    %c0_i32_1 = arith.constant 0 : i32
    return %c0_i32, %c0_i32_0 : i32, i32
  }
  func.func @transform_7(%arg0: i32) -> (i32, i32, i32) {
    %c0_i32 = arith.constant 0 : i32
    %c0_i32_0 = arith.constant 0 : i32
    %c0_i32_1 = arith.constant 0 : i32
    return %arg0, %c0_i32, %c0_i32_0 : i32, i32, i32
  }
}

</mosaic_0001>

<llo_original>
// kernel: tpu_custom_call.1
$region0: #{tpu_custom_call.1}
  #allocation0 [shape = 'u32[]', space=smem, size = 0x4, offset = 0x4, fixed_abs, tag = 'smem constant byte address 0x4 - core index']
  #allocation1 [shape = 'u32[72,128]{1,0:T(1,128)}', space=vmem, size = 0x9000, scoped, tag = 'internal scratch']
  #allocation2 [shape = 'bf16[4,16,768]{2,1,0:T(8,128)(2,1)}', space=vmem, size = 0x18000, scoped, tag = 'scratch operand']
  %s0 = inlined_call_operand.hbm [shape: bf16[8,16,256], index: 0, kind: input, shape index: {}]
  %s1 = inlined_call_operand.hbm [shape: bf16[768,256], index: 1, kind: input, shape index: {}]
  %s2 = inlined_call_operand.hbm [shape: bf16[768,256], index: 2, kind: input, shape index: {}]
  %s3 = inlined_call_operand.vmem [shape: f32[1,256], index: 3, kind: input, shape index: {}]
  %s4 = inlined_call_operand.hbm [shape: f32[1,256], index: 4, kind: input, shape index: {}]
  %s5 = inlined_call_operand.vmem [shape: f32[1,256], index: 5, kind: input, shape index: {}]
  %s6 = inlined_call_operand.hbm [shape: f32[1,256], index: 6, kind: input, shape index: {}]
  %s7 = inlined_call_operand.hbm [shape: bf16[8,16,256], index: 7, kind: output, shape index: {}]
  %s8 = sld [smem:[#allocation0]]
  $region81: #{tpu_custom_call.1} parent=0
    _
  %s10 = ssub.s32 1, %s8
  %s11 = scalar_select 0, %s10, %s8
  $region1: #{tpu_custom_call.1} parent=0
    #allocation3 [shape = 'u8[65536]{0}', space=vmem, size = 0x10000, scoped, tag = 'input window, operand 0']
    #allocation4 [shape = 's32[2]{0}', space=sflag, size = 0x8, scoped, tag = 'scoped memory for tpu_custom_call.1']
    #allocation5 [shape = 's32[2]{0}', space=sflag, size = 0x8, scoped, tag = 'scoped memory for tpu_custom_call.1']
    #allocation6 [shape = 'u8[393216]{0}', space=vmem, size = 0x60000, scoped, tag = 'input window, operand 1, single buffered']
    #allocation7 [shape = 's32[1]{0}', space=sflag, size = 0x4, scoped, tag = 'scoped memory for tpu_custom_call.1']
    #allocation8 [shape = 'u8[393216]{0}', space=vmem, size = 0x60000, scoped, tag = 'input window, operand 2, single buffered']
    #allocation9 [shape = 'u8[1024]{0}', space=vmem, size = 0x400, scoped, tag = 'input window, operand 4, single buffered']
    #allocation10 [shape = 's32[1]{0}', space=sflag, size = 0x4, scoped, tag = 'scoped memory for tpu_custom_call.1']
    #allocation11 [shape = 'u8[1024]{0}', space=vmem, size = 0x400, scoped, tag = 'input window, operand 6, single buffered']
    #allocation12 [shape = 'u8[65536]{0}', space=vmem, size = 0x10000, scoped, tag = 'output window, operand 0']
    %12 = vsyncpa [#allocation4], 0
    %s13 = scalar_lea.sflag [#allocation4], 1
    %14 = vsyncpa %s13, 0
    %15 = vsyncpa [#allocation7], 0
    %16 = vsyncpa [#allocation10], 0
    %17 = vsyncpa [#allocation5], 0
    %s18 = scalar_lea.sflag [#allocation5], 1
    %19 = vsyncpa %s18, 0
    loop: start=0, step=1, limit=4
    $region2: #{tpu_custom_call.1} parent=1 // loop_pre_header
      _
    $region3: #{tpu_custom_call.1} parent=1 // loop_header
      %s21 = sphi 0, %s25
      %p22 = scmp.ge.s32.totalorder %s21, 4
      %s31 = sphi 0, %s33
      %s34 = sphi 0, %s31
      %s35 = sphi 0, %s34
      %s51 = sphi 0, %s35
      %s55 = sphi 0, %s55
      %s57 = sphi 0, %s55
      %s58 = sphi 0, %s57
      %s72 = sphi 0, %s58
      %s76 = sphi 0, %s76
      %s78 = sphi 0, %s76
      %s79 = sphi 0, %s78
      %s93 = sphi 0, %s79
      %s97 = sphi 0, %s97
      %s99 = sphi 0, %s97
      %s100 = sphi 0, %s99
      %s114 = sphi 0, %s100
      %s118 = sphi 0, %s118
      %s120 = sphi 0, %s118
      %s121 = sphi 0, %s120
      %s135 = sphi 0, %s121
      %s139 = sphi 0, %s139
      %s141 = sphi 0, %s139
      %s142 = sphi 0, %s141
      %s156 = sphi 0, %s142
      %s160 = sphi 0, %s160
      %s162 = sphi 0, %s160
      %s163 = sphi 0, %s162
      %s177 = sphi 0, %s163
      %s183 = sphi 0, %s185
      %s186 = sphi 0, %s183
      %s187 = sphi 0, %s186
      %s203 = sphi 0, %s187
    $region4: #{tpu_custom_call.1} parent=1 // loop_header_branch
      %24 = sbr.rel (%p22) target = $region8
    $region5: #{tpu_custom_call.1} parent=1 // loop_body
      %s26 = ssub.s32 %s21, 1
      %s27 = ssub.s32 %s21, 2
      %s28 = sadd.s32 %s21, 1
      %s29 = ssub.s32 %s21, %s28
      %p30 = scmp.eq.s32.totalorder %s29, 0
      %s32 = sadd.s32 %s31, 1
      %s33 = scalar_select %p30, %s31, %s32
      %p36 = pneg %p30
      %p37 = scmp.eq.s32.totalorder %s21, 1
      %p38 = por %p36, %p37
      %p39 = scmp.ne.s32.totalorder %s31, %s34
      %p40 = scmp.eq.s32.totalorder %s21, 0
      %p41 = por %p39, %p40
      %p42 = scmp.ne.s32.totalorder %s31, %s34
      %p43 = scmp.eq.s32.totalorder %s26, 1
      %p44 = por %p42, %p43
      %p45 = scmp.ne.s32.totalorder %s34, %s35
      %p46 = scmp.eq.s32.totalorder %s26, 0
      %p47 = por %p45, %p46
      %p48 = scmp.ne.s32.totalorder %s34, %s35
      %p49 = scmp.eq.s32.totalorder %s27, 1
      %p50 = por %p48, %p49
      %p52 = scmp.ne.s32.totalorder %s35, %s51
      %p53 = scmp.eq.s32.totalorder %s27, 0
      %p54 = por %p52, %p53
      %s56 = sadd.s32 %s55, 1
      %p59 = scmp.eq.s32.totalorder %s21, 1
      %p60 = scmp.ne.s32.totalorder %s55, %s57
      %p61 = scmp.eq.s32.totalorder %s21, 0
      %p62 = por %p60, %p61
      %p63 = scmp.ne.s32.totalorder %s55, %s57
      %p64 = scmp.eq.s32.totalorder %s26, 1
      %p65 = por %p63, %p64
      %p66 = scmp.ne.s32.totalorder %s57, %s58
      %p67 = scmp.eq.s32.totalorder %s26, 0
      %p68 = por %p66, %p67
      %p69 = scmp.ne.s32.totalorder %s57, %s58
      %p70 = scmp.eq.s32.totalorder %s27, 1
      %p71 = por %p69, %p70
      %p73 = scmp.ne.s32.totalorder %s58, %s72
      %p74 = scmp.eq.s32.totalorder %s27, 0
      %p75 = por %p73, %p74
      %s77 = sadd.s32 %s76, 1
      %p80 = scmp.eq.s32.totalorder %s21, 1
      %p81 = scmp.ne.s32.totalorder %s76, %s78
      %p82 = scmp.eq.s32.totalorder %s21, 0
      %p83 = por %p81, %p82
      %p84 = scmp.ne.s32.totalorder %s76, %s78
      %p85 = scmp.eq.s32.totalorder %s26, 1
      %p86 = por %p84, %p85
      %p87 = scmp.ne.s32.totalorder %s78, %s79
      %p88 = scmp.eq.s32.totalorder %s26, 0
      %p89 = por %p87, %p88
      %p90 = scmp.ne.s32.totalorder %s78, %s79
      %p91 = scmp.eq.s32.totalorder %s27, 1
      %p92 = por %p90, %p91
      %p94 = scmp.ne.s32.totalorder %s79, %s93
      %p95 = scmp.eq.s32.totalorder %s27, 0
      %p96 = por %p94, %p95
      %s98 = sadd.s32 %s97, 1
      %p101 = scmp.eq.s32.totalorder %s21, 1
      %p102 = scmp.ne.s32.totalorder %s97, %s99
      %p103 = scmp.eq.s32.totalorder %s21, 0
      %p104 = por %p102, %p103
      %p105 = scmp.ne.s32.totalorder %s97, %s99
      %p106 = scmp.eq.s32.totalorder %s26, 1
      %p107 = por %p105, %p106
      %p108 = scmp.ne.s32.totalorder %s99, %s100
      %p109 = scmp.eq.s32.totalorder %s26, 0
      %p110 = por %p108, %p109
      %p111 = scmp.ne.s32.totalorder %s99, %s100
      %p112 = scmp.eq.s32.totalorder %s27, 1
      %p113 = por %p111, %p112
      %p115 = scmp.ne.s32.totalorder %s100, %s114
      %p116 = scmp.eq.s32.totalorder %s27, 0
      %p117 = por %p115, %p116
      %s119 = sadd.s32 %s118, 1
      %p122 = scmp.eq.s32.totalorder %s21, 1
      %p123 = scmp.ne.s32.totalorder %s118, %s120
      %p124 = scmp.eq.s32.totalorder %s21, 0
      %p125 = por %p123, %p124
      %p126 = scmp.ne.s32.totalorder %s118, %s120
      %p127 = scmp.eq.s32.totalorder %s26, 1
      %p128 = por %p126, %p127
      %p129 = scmp.ne.s32.totalorder %s120, %s121
      %p130 = scmp.eq.s32.totalorder %s26, 0
      %p131 = por %p129, %p130
      %p132 = scmp.ne.s32.totalorder %s120, %s121
      %p133 = scmp.eq.s32.totalorder %s27, 1
      %p134 = por %p132, %p133
      %p136 = scmp.ne.s32.totalorder %s121, %s135
      %p137 = scmp.eq.s32.totalorder %s27, 0
      %p138 = por %p136, %p137
      %s140 = sadd.s32 %s139, 1
      %p143 = scmp.eq.s32.totalorder %s21, 1
      %p144 = scmp.ne.s32.totalorder %s139, %s141
      %p145 = scmp.eq.s32.totalorder %s21, 0
      %p146 = por %p144, %p145
      %p147 = scmp.ne.s32.totalorder %s139, %s141
      %p148 = scmp.eq.s32.totalorder %s26, 1
      %p149 = por %p147, %p148
      %p150 = scmp.ne.s32.totalorder %s141, %s142
      %p151 = scmp.eq.s32.totalorder %s26, 0
      %p152 = por %p150, %p151
      %p153 = scmp.ne.s32.totalorder %s141, %s142
      %p154 = scmp.eq.s32.totalorder %s27, 1
      %p155 = por %p153, %p154
      %p157 = scmp.ne.s32.totalorder %s142, %s156
      %p158 = scmp.eq.s32.totalorder %s27, 0
      %p159 = por %p157, %p158
      %s161 = sadd.s32 %s160, 1
      %p164 = scmp.eq.s32.totalorder %s21, 1
      %p165 = scmp.ne.s32.totalorder %s160, %s162
      %p166 = scmp.eq.s32.totalorder %s21, 0
      %p167 = por %p165, %p166
      %p168 = scmp.ne.s32.totalorder %s160, %s162
      %p169 = scmp.eq.s32.totalorder %s26, 1
      %p170 = por %p168, %p169
      %p171 = scmp.ne.s32.totalorder %s162, %s163
      %p172 = scmp.eq.s32.totalorder %s26, 0
      %p173 = por %p171, %p172
      %p174 = scmp.ne.s32.totalorder %s162, %s163
      %p175 = scmp.eq.s32.totalorder %s27, 1
      %p176 = por %p174, %p175
      %p178 = scmp.ne.s32.totalorder %s163, %s177
      %p179 = scmp.eq.s32.totalorder %s27, 0
      %p180 = por %p178, %p179
      %s181 = ssub.s32 %s21, %s28
      %p182 = scmp.eq.s32.totalorder %s181, 0
      %s184 = sadd.s32 %s183, 1
      %s185 = scalar_select %p182, %s183, %s184
      %p188 = pneg %p182
      %p189 = scmp.eq.s32.totalorder %s21, 1
      %p190 = por %p188, %p189
      %p191 = scmp.ne.s32.totalorder %s183, %s186
      %p192 = scmp.eq.s32.totalorder %s21, 0
      %p193 = por %p191, %p192
      %p194 = scmp.ne.s32.totalorder %s183, %s186
      %p195 = scmp.eq.s32.totalorder %s26, 1
      %p196 = por %p194, %p195
      %p197 = scmp.ne.s32.totalorder %s186, %s187
      %p198 = scmp.eq.s32.totalorder %s26, 0
      %p199 = por %p197, %p198
      %p200 = scmp.ne.s32.totalorder %s186, %s187
      %p201 = scmp.eq.s32.totalorder %s27, 1
      %p202 = por %p200, %p201
      %p204 = scmp.ne.s32.totalorder %s187, %s203
      %p205 = scmp.eq.s32.totalorder %s27, 0
      %p206 = por %p204, %p205
      %p207 = scmp.le.s32.totalorder 1, %s21
      %p208 = scmp.lt.s32.totalorder %s21, 3
      %p209 = pnand %p207, %p208
      %p210 = pneg %p209
      // Predicated region
      $region9: #{tpu_custom_call.1} parent=5 // pred_check
        _
      $region10: #{tpu_custom_call.1} parent=5 // pred_check_branch
        %212 = sbr.rel (%p209) target = $region12
      $region11: #{tpu_custom_call.1} parent=5 // pred_region
        %s213 = ssub.s32 %s21, 1
        // Predicated region
        $region13: #{tpu_custom_call.1} parent=11 // pred_check
          %p214 = pneg %p68
        $region14: #{tpu_custom_call.1} parent=11 // pred_check_branch
          %216 = sbr.rel (%p214) target = $region16
        $region15: #{tpu_custom_call.1} parent=11 // pred_region
          %218 = vsyncadd [#allocation7], 0
          %s219 = sshll.u32 %s1, 4
          %s220 = int_to_ptr.hbm [resolvable:$true] %s219
          %s221 = sshll.u32 [#allocation6], 4
          %s222 = int_to_ptr.vmem [resolvable:$true] %s221
          %227 = dma.hbm_to_vmem [thread:$0]  %s220, 12288, %s222, [#allocation7], 128, 128, 8
        $region16: #{tpu_custom_call.1} parent=11 // pred_fallthru
          _
        // Predicated region
        $region17: #{tpu_custom_call.1} parent=11 // pred_check
          %p228 = pneg %p89
        $region18: #{tpu_custom_call.1} parent=11 // pred_check_branch
          %230 = sbr.rel (%p228) target = $region20
        $region19: #{tpu_custom_call.1} parent=11 // pred_region
          %232 = vsyncadd [#allocation7], 0
          %s233 = sshll.u32 %s2, 4
          %s234 = int_to_ptr.hbm [resolvable:$true] %s233
          %s235 = sshll.u32 [#allocation8], 4
          %s236 = int_to_ptr.vmem [resolvable:$true] %s235
          %241 = dma.hbm_to_vmem [thread:$0]  %s234, 12288, %s236, [#allocation7], 128, 128, 8
        $region20: #{tpu_custom_call.1} parent=11 // pred_fallthru
          _
        // Predicated region
        $region21: #{tpu_custom_call.1} parent=11 // pred_check
          %p242 = pneg %p110
        $region22: #{tpu_custom_call.1} parent=11 // pred_check_branch
          %244 = sbr.rel (%p242) target = $region24
        $region23: #{tpu_custom_call.1} parent=11 // pred_region
          _
        $region24: #{tpu_custom_call.1} parent=11 // pred_fallthru
          _
        // Predicated region
        $region25: #{tpu_custom_call.1} parent=11 // pred_check
          %p245 = pneg %p131
        $region26: #{tpu_custom_call.1} parent=11 // pred_check_branch
          %247 = sbr.rel (%p245) target = $region28
        $region27: #{tpu_custom_call.1} parent=11 // pred_region
          %249 = vsyncadd [#allocation10], 0
          %s251 = sshll.u32 %s4, 4
          %s252 = int_to_ptr.hbm [resolvable:$true] %s251
          %s253 = sshll.u32 [#allocation9], 4
          %s254 = int_to_ptr.vmem [resolvable:$true] %s253
          %256 = dma.hbm_to_vmem [thread:$0]  %s252, 32, %s254, [#allocation10]
        $region28: #{tpu_custom_call.1} parent=11 // pred_fallthru
          _
        // Predicated region
        $region29: #{tpu_custom_call.1} parent=11 // pred_check
          %p257 = pneg %p152
        $region30: #{tpu_custom_call.1} parent=11 // pred_check_branch
          %259 = sbr.rel (%p257) target = $region32
        $region31: #{tpu_custom_call.1} parent=11 // pred_region
          _
        $region32: #{tpu_custom_call.1} parent=11 // pred_fallthru
          _
        // Predicated region
        $region33: #{tpu_custom_call.1} parent=11 // pred_check
          %p260 = pneg %p173
        $region34: #{tpu_custom_call.1} parent=11 // pred_check_branch
          %262 = sbr.rel (%p260) target = $region36
        $region35: #{tpu_custom_call.1} parent=11 // pred_region
          %264 = vsyncadd [#allocation10], 0
          %s266 = sshll.u32 %s6, 4
          %s267 = int_to_ptr.hbm [resolvable:$true] %s266
          %s268 = sshll.u32 [#allocation11], 4
          %s269 = int_to_ptr.vmem [resolvable:$true] %s268
          %271 = dma.hbm_to_vmem [thread:$0]  %s267, 32, %s269, [#allocation10]
        $region36: #{tpu_custom_call.1} parent=11 // pred_fallthru
          _
      $region12: #{tpu_custom_call.1} parent=5 // pred_fallthru
        _
      %p272 = scmp.lt.s32.totalorder %s21, 2
      // Predicated region
      $region37: #{tpu_custom_call.1} parent=5 // pred_check
        %p273 = pneg %p272
      $region38: #{tpu_custom_call.1} parent=5 // pred_check_branch
        %275 = sbr.rel (%p273) target = $region40
      $region39: #{tpu_custom_call.1} parent=5 // pred_region
        // Predicated region
        $region41: #{tpu_custom_call.1} parent=39 // pred_check
          %p276 = pneg %p41
        $region42: #{tpu_custom_call.1} parent=39 // pred_check_branch
          %278 = sbr.rel (%p276) target = $region44
        $region43: #{tpu_custom_call.1} parent=39 // pred_region
          %s279 = sand.u32 %s31, 1
          %s280 = scalar_lea.sflag [#allocation4], %s279
          %s281 = sand.u32 %s31, 1
          %s282 = smul.addr %s281, 64
          %s283 = scalar_lea.vmem [#allocation3], %s282
          %s284 = smul.u32 4, %s21
          %286 = vsyncadd %s280, 0
          %s287 = smul.addr %s284, 4
          %s288 = smul.addr %s287, 4
          %s289 = scalar_lea.hbm %s0, %s288
          %s290 = sshll.u32 %s289, 4
          %s291 = int_to_ptr.hbm [resolvable:$true] %s290
          %s292 = sshll.u32 %s283, 4
          %s293 = int_to_ptr.vmem [resolvable:$true] %s292
          %298 = dma.hbm_to_vmem [thread:$0]  %s291, 1024, %s293, %s280, 128, 128, 8
        $region44: #{tpu_custom_call.1} parent=39 // pred_fallthru
          _
      $region40: #{tpu_custom_call.1} parent=5 // pred_fallthru
        _
      %p299 = scmp.le.s32.totalorder 1, %s21
      %p300 = scmp.lt.s32.totalorder %s21, 3
      %p301 = pnand %p299, %p300
      %p302 = pneg %p301
      // Predicated region
      $region45: #{tpu_custom_call.1} parent=5 // pred_check
        _
      $region46: #{tpu_custom_call.1} parent=5 // pred_check_branch
        %304 = sbr.rel (%p301) target = $region48
      $region47: #{tpu_custom_call.1} parent=5 // pred_region
        %s305 = ssub.s32 %s21, 1
        %s306 = sand.u32 %s34, 1
        %s307 = scalar_lea.sflag [#allocation4], %s306
        %s308 = sand.u32 %s34, 1
        %s309 = smul.addr %s308, 64
        %s310 = scalar_lea.vmem [#allocation3], %s309
        // Predicated region
        $region49: #{tpu_custom_call.1} parent=47 // pred_check
          %p311 = pneg %p47
        $region50: #{tpu_custom_call.1} parent=47 // pred_check_branch
          %313 = sbr.rel (%p311) target = $region52
        $region51: #{tpu_custom_call.1} parent=47 // pred_region
          %315 = dma.done %s307, 1024
        $region52: #{tpu_custom_call.1} parent=47 // pred_fallthru
          _
        // Predicated region
        $region53: #{tpu_custom_call.1} parent=47 // pred_check
          %p316 = pneg %p68
        $region54: #{tpu_custom_call.1} parent=47 // pred_check_branch
          %318 = sbr.rel (%p316) target = $region56
        $region55: #{tpu_custom_call.1} parent=47 // pred_region
          %320 = dma.done [#allocation7], 12288
        $region56: #{tpu_custom_call.1} parent=47 // pred_fallthru
          _
        // Predicated region
        $region57: #{tpu_custom_call.1} parent=47 // pred_check
          %p321 = pneg %p89
        $region58: #{tpu_custom_call.1} parent=47 // pred_check_branch
          %323 = sbr.rel (%p321) target = $region60
        $region59: #{tpu_custom_call.1} parent=47 // pred_region
          %325 = dma.done [#allocation7], 12288
        $region60: #{tpu_custom_call.1} parent=47 // pred_fallthru
          _
        // Predicated region
        $region61: #{tpu_custom_call.1} parent=47 // pred_check
          %p326 = pneg %p131
        $region62: #{tpu_custom_call.1} parent=47 // pred_check_branch
          %328 = sbr.rel (%p326) target = $region64
        $region63: #{tpu_custom_call.1} parent=47 // pred_region
          %330 = dma.done [#allocation10], 32
        $region64: #{tpu_custom_call.1} parent=47 // pred_fallthru
          _
        // Predicated region
        $region65: #{tpu_custom_call.1} parent=47 // pred_check
          %p331 = pneg %p173
        $region66: #{tpu_custom_call.1} parent=47 // pred_check_branch
          %333 = sbr.rel (%p331) target = $region68
        $region67: #{tpu_custom_call.1} parent=47 // pred_region
          %335 = dma.done [#allocation10], 32
        $region68: #{tpu_custom_call.1} parent=47 // pred_fallthru
          _
        %s336 = sand.u32 %s34, 1
        %s337 = scalar_lea.sflag [#allocation4], %s336
        %s338 = sand.u32 %s34, 1
        %s339 = smul.addr %s338, 64
        %s340 = scalar_lea.vmem [#allocation3], %s339
        %p341 = pneg %p47
        %p342 = pneg %p44
        %p343 = pneg %p68
        %p344 = pneg %p65
        %p345 = pneg %p89
        %p346 = pneg %p86
        %p347 = pneg %p110
        %p348 = pneg %p107
        %p349 = pneg %p131
        %p350 = pneg %p128
        %p351 = pneg %p152
        %p352 = pneg %p149
        %p353 = pneg %p173
        %p354 = pneg %p170
        %p355 = pneg %p199
        %p356 = pneg %p196
        %s357 = sand.u32 %s186, 1
        %s358 = scalar_lea.sflag [#allocation5], %s357
        %s359 = sand.u32 %s186, 1
        %s360 = smul.addr %s359, 64
        %s361 = scalar_lea.vmem [#allocation12], %s360
        %s362 = smul.u32 4, %s26
        %s363 = smul.u32 4, %s26
        %v365 = vld [vmem:[%s310] sm:$0xff]
        %v366 = vld [vmem:[%s310 + $0x8] sm:$0xff]
        %v367 = vld [vmem:[%s310 + $0x10] sm:$0xff]
        %v368 = vld [vmem:[%s310 + $0x18] sm:$0xff]
        %v369 = vld [vmem:[%s310 + $0x20] sm:$0xff]
        %v370 = vld [vmem:[%s310 + $0x28] sm:$0xff]
        %v371 = vld [vmem:[%s310 + $0x30] sm:$0xff]
        %v372 = vld [vmem:[%s310 + $0x38] sm:$0xff]
        %vm373 = vcmask 1040384
        %vm374 = vsmask.f32 256
        %vm375 = vmand %vm373, %vm374
        %vm376 = vcmask 1044484
        %vm377 = vsmask.f32 4352
        %vm378 = vmand %vm376, %vm377
        %vm379 = vmor %vm378, %vm375
        %v380 = vld [vmem:[#allocation2] sm:$0x11]
        %v381 = vsel %vm379, 0, %v380
        %382 = vst [vmem:[#allocation2] sm:$0x11] %v381
        %v383 = vld [vmem:[#allocation2 + $0x30] sm:$0x11]
        %v384 = vsel %vm379, 0, %v383
        %385 = vst [vmem:[#allocation2 + $0x30] sm:$0x11] %v384
        %v386 = vld [vmem:[#allocation2 + $0x60] sm:$0x11]
        %v387 = vsel %vm379, 0, %v386
        %388 = vst [vmem:[#allocation2 + $0x60] sm:$0x11] %v387
        %v389 = vld [vmem:[#allocation2 + $0x90] sm:$0x11]
        %v390 = vsel %vm379, 0, %v389
        %391 = vst [vmem:[#allocation2 + $0x90] sm:$0x11] %v390
        %vm392 = vsmask.f32 4368
        %vm393 = vmor %vm374, %vm392
        %v395 = vshrl.u32 %v365, 16
        %v397 = vrot.slane %v395, 7
        %v398 = vshll.u32 %v365, 16
        %v400 = vor.u32 %v397, %v398
        %v401 = vrot.slane %v397, 4
        %v403 = vshrl.u32 %v366, 16
        %v405 = vrot.slane %v403, 7
        %v406 = vshll.u32 %v366, 16
        %v408 = vor.u32 %v405, %v406
        %v409 = vsel %vm393, %v401, %v408
        %v411 = vshrl.u32 %v367, 16
        %v413 = vrot.slane %v411, 7
        %v414 = vshll.u32 %v367, 16
        %v416 = vor.u32 %v413, %v414
        %v417 = vrot.slane %v413, 4
        %v419 = vshrl.u32 %v368, 16
        %v421 = vrot.slane %v419, 7
        %v422 = vshll.u32 %v368, 16
        %v424 = vor.u32 %v421, %v422
        %v425 = vsel %vm393, %v417, %v424
        %v427 = vshrl.u32 %v369, 16
        %v429 = vrot.slane %v427, 7
        %v430 = vshll.u32 %v369, 16
        %v432 = vor.u32 %v429, %v430
        %v433 = vrot.slane %v429, 4
        %v435 = vshrl.u32 %v370, 16
        %v437 = vrot.slane %v435, 7
        %v438 = vshll.u32 %v370, 16
        %v440 = vor.u32 %v437, %v438
        %v441 = vsel %vm393, %v433, %v440
        %v443 = vshrl.u32 %v371, 16
        %v445 = vrot.slane %v443, 7
        %v446 = vshll.u32 %v371, 16
        %v448 = vor.u32 %v445, %v446
        %v449 = vrot.slane %v445, 4
        %v451 = vshrl.u32 %v372, 16
        %v453 = vrot.slane %v451, 7
        %v454 = vshll.u32 %v372, 16
        %v456 = vor.u32 %v453, %v454
        %v457 = vsel %vm393, %v449, %v456
        %vm466 = vcmask 1043456
        %vm467 = vsmask.f32 7938
        %vm468 = vmand %vm466, %vm467
        %vm469 = vcmask 1047556
        %vm470 = vsmask.f32 7954
        %vm471 = vmand %vm469, %vm470
        %vm472 = vmor %vm471, %vm468
        %v473 = vld [vmem:[#allocation2] sm:$0xff]
        %v474 = vsel %vm472, %v400, %v473
        %475 = vst [vmem:[#allocation2] sm:$0xff] %v474
        %476 = vst [vmem:[#allocation2 + $0x18] sm:$0xff] %v409
        %v477 = vld [vmem:[#allocation2 + $0x30] sm:$0xff]
        %v478 = vsel %vm472, %v416, %v477
        %479 = vst [vmem:[#allocation2 + $0x30] sm:$0xff] %v478
        %480 = vst [vmem:[#allocation2 + $0x48] sm:$0xff] %v425
        %v481 = vld [vmem:[#allocation2 + $0x60] sm:$0xff]
        %v482 = vsel %vm472, %v432, %v481
        %483 = vst [vmem:[#allocation2 + $0x60] sm:$0xff] %v482
        %484 = vst [vmem:[#allocation2 + $0x78] sm:$0xff] %v441
        %v485 = vld [vmem:[#allocation2 + $0x90] sm:$0xff]
        %v486 = vsel %vm472, %v448, %v485
        %487 = vst [vmem:[#allocation2 + $0x90] sm:$0xff] %v486
        %488 = vst [vmem:[#allocation2 + $0xa8] sm:$0xff] %v457
        %489 = vst [vmem:[#allocation2 + $0x8] sm:$0xff] %v365
        %490 = vst [vmem:[#allocation2 + $0x20] sm:$0xff] %v366
        %491 = vst [vmem:[#allocation2 + $0x38] sm:$0xff] %v367
        %492 = vst [vmem:[#allocation2 + $0x50] sm:$0xff] %v368
        %493 = vst [vmem:[#allocation2 + $0x68] sm:$0xff] %v369
        %494 = vst [vmem:[#allocation2 + $0x80] sm:$0xff] %v370
        %495 = vst [vmem:[#allocation2 + $0x98] sm:$0xff] %v371
        %496 = vst [vmem:[#allocation2 + $0xb0] sm:$0xff] %v372
        %vm497 = vsmask.f32 3328
        %vm498 = vsmask.f32 7440
        %vm499 = vmor %vm497, %vm498
        %v500 = vrot.slane %v395, 4
        %v501 = vrot.slane %v398, 5
        %v502 = vor.u32 %v500, %v501
        %v503 = vrot.slane %v502, 4
        %v504 = vrot.slane %v406, 5
        %v505 = vsel %vm499, %v503, %v504
        %v506 = vrot.slane %v403, 4
        %v507 = vor.u32 %v506, %v504
        %v508 = vrot.slane %v507, 4
        %v509 = vrot.slane %v411, 4
        %v510 = vrot.slane %v414, 5
        %v511 = vor.u32 %v509, %v510
        %v512 = vrot.slane %v511, 4
        %v513 = vrot.slane %v422, 5
        %v514 = vsel %vm499, %v512, %v513
        %v515 = vrot.slane %v419, 4
        %v516 = vor.u32 %v515, %v513
        %v517 = vrot.slane %v516, 4
        %v518 = vrot.slane %v427, 4
        %v519 = vrot.slane %v430, 5
        %v520 = vor.u32 %v518, %v519
        %v521 = vrot.slane %v520, 4
        %v522 = vrot.slane %v438, 5
        %v523 = vsel %vm499, %v521, %v522
        %v524 = vrot.slane %v435, 4
        %v525 = vor.u32 %v524, %v522
        %v526 = vrot.slane %v525, 4
        %v527 = vrot.slane %v443, 4
        %v528 = vrot.slane %v446, 5
        %v529 = vor.u32 %v527, %v528
        %v530 = vrot.slane %v529, 4
        %v531 = vrot.slane %v454, 5
        %v532 = vsel %vm499, %v530, %v531
        %v533 = vrot.slane %v451, 4
        %v534 = vor.u32 %v533, %v531
        %v535 = vrot.slane %v534, 4
        %544 = vst [vmem:[#allocation2 + $0x10] sm:$0xff] %v505
        %vm545 = vmand %vm466, %vm497
        %vm546 = vsmask.f32 7424
        %vm547 = vmand %vm469, %vm546
        %vm548 = vmor %vm547, %vm545
        %v549 = vld [vmem:[#allocation2 + $0x28] sm:$0xff]
        %v550 = vsel %vm548, %v508, %v549
        %551 = vst [vmem:[#allocation2 + $0x28] sm:$0xff] %v550
        %552 = vst [vmem:[#allocation2 + $0x40] sm:$0xff] %v514
        %v553 = vld [vmem:[#allocation2 + $0x58] sm:$0xff]
        %v554 = vsel %vm548, %v517, %v553
        %555 = vst [vmem:[#allocation2 + $0x58] sm:$0xff] %v554
        %556 = vst [vmem:[#allocation2 + $0x70] sm:$0xff] %v523
        %v557 = vld [vmem:[#allocation2 + $0x88] sm:$0xff]
        %v558 = vsel %vm548, %v526, %v557
        %559 = vst [vmem:[#allocation2 + $0x88] sm:$0xff] %v558
        %560 = vst [vmem:[#allocation2 + $0xa0] sm:$0xff] %v532
        %v561 = vld [vmem:[#allocation2 + $0xb8] sm:$0xff]
        %v562 = vsel %vm548, %v535, %v561
        %563 = vst [vmem:[#allocation2 + $0xb8] sm:$0xff] %v562
        %vm564 = vcmask 1043459
        %vm565 = vsmask.f32 7950
        %vm566 = vmand %vm564, %vm565
        %vm567 = vcmask 1047559
        %vm568 = vsmask.f32 7966
        %vm569 = vmand %vm567, %vm568
        %vm570 = vmor %vm569, %vm566
        %v571 = vld [vmem:[#allocation2 + $0x28] sm:$0x88]
        %v572 = vsel %vm570, 0, %v571
        %573 = vst [vmem:[#allocation2 + $0x28] sm:$0x88] %v572
        %v574 = vld [vmem:[#allocation2 + $0x58] sm:$0x88]
        %v575 = vsel %vm570, 0, %v574
        %576 = vst [vmem:[#allocation2 + $0x58] sm:$0x88] %v575
        %v577 = vld [vmem:[#allocation2 + $0x88] sm:$0x88]
        %v578 = vsel %vm570, 0, %v577
        %579 = vst [vmem:[#allocation2 + $0x88] sm:$0x88] %v578
        %v580 = vld [vmem:[#allocation2 + $0xb8] sm:$0x88]
        %v581 = vsel %vm570, 0, %v580
        %582 = vst [vmem:[#allocation2 + $0xb8] sm:$0x88] %v581
        %v583 = vld [vmem:[#allocation2] sm:$0xff]
        %v584 = vld [vmem:[#allocation2 + $0x8] sm:$0xff]
        %v585 = vld [vmem:[#allocation2 + $0x10] sm:$0xff]
        %v586 = vld [vmem:[#allocation2 + $0x18] sm:$0xff]
        %v587 = vld [vmem:[#allocation2 + $0x20] sm:$0xff]
        %v588 = vld [vmem:[#allocation2 + $0x28] sm:$0xff]
        %v589 = vld [vmem:[#allocation2 + $0x30] sm:$0xff]
        %v590 = vld [vmem:[#allocation2 + $0x38] sm:$0xff]
        %v591 = vld [vmem:[#allocation2 + $0x40] sm:$0xff]
        %v592 = vld [vmem:[#allocation2 + $0x48] sm:$0xff]
        %v593 = vld [vmem:[#allocation2 + $0x50] sm:$0xff]
        %v594 = vld [vmem:[#allocation2 + $0x58] sm:$0xff]
        %v595 = vld [vmem:[#allocation2 + $0x60] sm:$0xff]
        %v596 = vld [vmem:[#allocation2 + $0x68] sm:$0xff]
        %v597 = vld [vmem:[#allocation2 + $0x70] sm:$0xff]
        %v598 = vld [vmem:[#allocation2 + $0x78] sm:$0xff]
        %v599 = vld [vmem:[#allocation2 + $0x80] sm:$0xff]
        %v600 = vld [vmem:[#allocation2 + $0x88] sm:$0xff]
        %v601 = vld [vmem:[#allocation2 + $0x90] sm:$0xff]
        %v602 = vld [vmem:[#allocation2 + $0x98] sm:$0xff]
        %v603 = vld [vmem:[#allocation2 + $0xa0] sm:$0xff]
        %v604 = vld [vmem:[#allocation2 + $0xa8] sm:$0xff]
        %v605 = vld [vmem:[#allocation2 + $0xb0] sm:$0xff]
        %v606 = vld [vmem:[#allocation2 + $0xb8] sm:$0xff]
        %v607 = vld [vmem:[#allocation6] sm:$0xff]
        %v608 = vld [vmem:[#allocation6 + $0x8] sm:$0xff]
        %v609 = vld [vmem:[#allocation6 + $0x10] sm:$0xff]
        %v610 = vld [vmem:[#allocation6 + $0x18] sm:$0xff]
        %v611 = vld [vmem:[#allocation6 + $0x20] sm:$0xff]
        %v612 = vld [vmem:[#allocation6 + $0x28] sm:$0xff]
        %v613 = vld [vmem:[#allocation6 + $0x30] sm:$0xff]
        %v614 = vld [vmem:[#allocation6 + $0x38] sm:$0xff]
        %v615 = vld [vmem:[#allocation6 + $0x40] sm:$0xff]
        %v616 = vld [vmem:[#allocation6 + $0x48] sm:$0xff]
        %v617 = vld [vmem:[#allocation6 + $0x50] sm:$0xff]
        %v618 = vld [vmem:[#allocation6 + $0x58] sm:$0xff]
        %v619 = vld [vmem:[#allocation6 + $0x60] sm:$0xff]
        %v620 = vld [vmem:[#allocation6 + $0x68] sm:$0xff]
        %v621 = vld [vmem:[#allocation6 + $0x70] sm:$0xff]
        %v622 = vld [vmem:[#allocation6 + $0x78] sm:$0xff]
        %v623 = vld [vmem:[#allocation6 + $0x80] sm:$0xff]
        %v624 = vld [vmem:[#allocation6 + $0x88] sm:$0xff]
        %v625 = vld [vmem:[#allocation6 + $0x90] sm:$0xff]
        %v626 = vld [vmem:[#allocation6 + $0x98] sm:$0xff]
        %v627 = vld [vmem:[#allocation6 + $0xa0] sm:$0xff]
        %v628 = vld [vmem:[#allocation6 + $0xa8] sm:$0xff]
        %v629 = vld [vmem:[#allocation6 + $0xb0] sm:$0xff]
        %v630 = vld [vmem:[#allocation6 + $0xb8] sm:$0xff]
        %v631 = vld [vmem:[#allocation6 + $0xc0] sm:$0xff]
        %v632 = vld [vmem:[#allocation6 + $0xc8] sm:$0xff]
        %v633 = vld [vmem:[#allocation6 + $0xd0] sm:$0xff]
        %v634 = vld [vmem:[#allocation6 + $0xd8] sm:$0xff]
        %v635 = vld [vmem:[#allocation6 + $0xe0] sm:$0xff]
        %v636 = vld [vmem:[#allocation6 + $0xe8] sm:$0xff]
        %v637 = vld [vmem:[#allocation6 + $0xf0] sm:$0xff]
        %v638 = vld [vmem:[#allocation6 + $0xf8] sm:$0xff]
        %v639 = vld [vmem:[#allocation6 + $0x100] sm:$0xff]
        %v640 = vld [vmem:[#allocation6 + $0x108] sm:$0xff]
        %v641 = vld [vmem:[#allocation6 + $0x110] sm:$0xff]
        %v642 = vld [vmem:[#allocation6 + $0x118] sm:$0xff]
        %v643 = vld [vmem:[#allocation6 + $0x120] sm:$0xff]
        %v644 = vld [vmem:[#allocation6 + $0x128] sm:$0xff]
        %v645 = vld [vmem:[#allocation6 + $0x130] sm:$0xff]
        %v646 = vld [vmem:[#allocation6 + $0x138] sm:$0xff]
        %v647 = vld [vmem:[#allocation6 + $0x140] sm:$0xff]
        %v648 = vld [vmem:[#allocation6 + $0x148] sm:$0xff]
        %v649 = vld [vmem:[#allocation6 + $0x150] sm:$0xff]
        %v650 = vld [vmem:[#allocation6 + $0x158] sm:$0xff]
        %v651 = vld [vmem:[#allocation6 + $0x160] sm:$0xff]
        %v652 = vld [vmem:[#allocation6 + $0x168] sm:$0xff]
        %v653 = vld [vmem:[#allocation6 + $0x170] sm:$0xff]
        %v654 = vld [vmem:[#allocation6 + $0x178] sm:$0xff]
        %v655 = vld [vmem:[#allocation6 + $0x180] sm:$0xff]
        %v656 = vld [vmem:[#allocation6 + $0x188] sm:$0xff]
        %v657 = vld [vmem:[#allocation6 + $0x190] sm:$0xff]
        %v658 = vld [vmem:[#allocation6 + $0x198] sm:$0xff]
        %v659 = vld [vmem:[#allocation6 + $0x1a0] sm:$0xff]
        %v660 = vld [vmem:[#allocation6 + $0x1a8] sm:$0xff]
        %v661 = vld [vmem:[#allocation6 + $0x1b0] sm:$0xff]
        %v662 = vld [vmem:[#allocation6 + $0x1b8] sm:$0xff]
        %v663 = vld [vmem:[#allocation6 + $0x1c0] sm:$0xff]
        %v664 = vld [vmem:[#allocation6 + $0x1c8] sm:$0xff]
        %v665 = vld [vmem:[#allocation6 + $0x1d0] sm:$0xff]
        %v666 = vld [vmem:[#allocation6 + $0x1d8] sm:$0xff]
        %v667 = vld [vmem:[#allocation6 + $0x1e0] sm:$0xff]
        %v668 = vld [vmem:[#allocation6 + $0x1e8] sm:$0xff]
        %v669 = vld [vmem:[#allocation6 + $0x1f0] sm:$0xff]
        %v670 = vld [vmem:[#allocation6 + $0x1f8] sm:$0xff]
        %v671 = vld [vmem:[#allocation6 + $0x200] sm:$0xff]
        %v672 = vld [vmem:[#allocation6 + $0x208] sm:$0xff]
        %v673 = vld [vmem:[#allocation6 + $0x210] sm:$0xff]
        %v674 = vld [vmem:[#allocation6 + $0x218] sm:$0xff]
        %v675 = vld [vmem:[#allocation6 + $0x220] sm:$0xff]
        %v676 = vld [vmem:[#allocation6 + $0x228] sm:$0xff]
        %v677 = vld [vmem:[#allocation6 + $0x230] sm:$0xff]
        %v678 = vld [vmem:[#allocation6 + $0x238] sm:$0xff]
        %v679 = vld [vmem:[#allocation6 + $0x240] sm:$0xff]
        %v680 = vld [vmem:[#allocation6 + $0x248] sm:$0xff]
        %v681 = vld [vmem:[#allocation6 + $0x250] sm:$0xff]
        %v682 = vld [vmem:[#allocation6 + $0x258] sm:$0xff]
        %v683 = vld [vmem:[#allocation6 + $0x260] sm:$0xff]
        %v684 = vld [vmem:[#allocation6 + $0x268] sm:$0xff]
        %v685 = vld [vmem:[#allocation6 + $0x270] sm:$0xff]
        %v686 = vld [vmem:[#allocation6 + $0x278] sm:$0xff]
        %v687 = vld [vmem:[#allocation6 + $0x280] sm:$0xff]
        %v688 = vld [vmem:[#allocation6 + $0x288] sm:$0xff]
        %v689 = vld [vmem:[#allocation6 + $0x290] sm:$0xff]
        %v690 = vld [vmem:[#allocation6 + $0x298] sm:$0xff]
        %v691 = vld [vmem:[#allocation6 + $0x2a0] sm:$0xff]
        %v692 = vld [vmem:[#allocation6 + $0x2a8] sm:$0xff]
        %v693 = vld [vmem:[#allocation6 + $0x2b0] sm:$0xff]
        %v694 = vld [vmem:[#allocation6 + $0x2b8] sm:$0xff]
        %v695 = vld [vmem:[#allocation6 + $0x2c0] sm:$0xff]
        %v696 = vld [vmem:[#allocation6 + $0x2c8] sm:$0xff]
        %v697 = vld [vmem:[#allocation6 + $0x2d0] sm:$0xff]
        %v698 = vld [vmem:[#allocation6 + $0x2d8] sm:$0xff]
        %v699 = vld [vmem:[#allocation6 + $0x2e0] sm:$0xff]
        %v700 = vld [vmem:[#allocation6 + $0x2e8] sm:$0xff]
        %v701 = vld [vmem:[#allocation6 + $0x2f0] sm:$0xff]
        %v702 = vld [vmem:[#allocation6 + $0x2f8] sm:$0xff]
        %v727 = vunpack.c.l.b16 %v583
        %v728 = vunpack.c.h.b16 %v583
        %v729 = vunpack.c.l.b16 %v584
        %v730 = vunpack.c.h.b16 %v584
        %v731 = vunpack.c.l.b16 %v585
        %v732 = vunpack.c.h.b16 %v585
        %v733 = vunpack.c.l.b16 %v586
        %v734 = vunpack.c.h.b16 %v586
        %v735 = vunpack.c.l.b16 %v587
        %v736 = vunpack.c.h.b16 %v587
        %v737 = vunpack.c.l.b16 %v588
        %v738 = vunpack.c.h.b16 %v588
        %v739 = vunpack.c.l.b16 %v589
        %v740 = vunpack.c.h.b16 %v589
        %v741 = vunpack.c.l.b16 %v590
        %v742 = vunpack.c.h.b16 %v590
        %v743 = vunpack.c.l.b16 %v591
        %v744 = vunpack.c.h.b16 %v591
        %v745 = vunpack.c.l.b16 %v592
        %v746 = vunpack.c.h.b16 %v592
        %v747 = vunpack.c.l.b16 %v593
        %v748 = vunpack.c.h.b16 %v593
        %v749 = vunpack.c.l.b16 %v594
        %v750 = vunpack.c.h.b16 %v594
        %v751 = vunpack.c.l.b16 %v595
        %v752 = vunpack.c.h.b16 %v595
        %v753 = vunpack.c.l.b16 %v596
        %v754 = vunpack.c.h.b16 %v596
        %v755 = vunpack.c.l.b16 %v597
        %v756 = vunpack.c.h.b16 %v597
        %v757 = vunpack.c.l.b16 %v598
        %v758 = vunpack.c.h.b16 %v598
        %v759 = vunpack.c.l.b16 %v599
        %v760 = vunpack.c.h.b16 %v599
        %v761 = vunpack.c.l.b16 %v600
        %v762 = vunpack.c.h.b16 %v600
        %v763 = vunpack.c.l.b16 %v601
        %v764 = vunpack.c.h.b16 %v601
        %v765 = vunpack.c.l.b16 %v602
        %v766 = vunpack.c.h.b16 %v602
        %v767 = vunpack.c.l.b16 %v603
        %v768 = vunpack.c.h.b16 %v603
        %v769 = vunpack.c.l.b16 %v604
        %v770 = vunpack.c.h.b16 %v604
        %v771 = vunpack.c.l.b16 %v605
        %v772 = vunpack.c.h.b16 %v605
        %v773 = vunpack.c.l.b16 %v606
        %v774 = vunpack.c.h.b16 %v606
        %v775 = vpack.c.b16 %v733, %v727
        %v776 = vpack.c.b16 %v734, %v728
        %v777 = vpack.c.b16 %v735, %v729
        %v778 = vpack.c.b16 %v736, %v730
        %v779 = vpack.c.b16 %v737, %v731
        %v780 = vpack.c.b16 %v738, %v732
        %v781 = vpack.c.b16 %v745, %v739
        %v782 = vpack.c.b16 %v746, %v740
        %v783 = vpack.c.b16 %v747, %v741
        %v784 = vpack.c.b16 %v748, %v742
        %v785 = vpack.c.b16 %v749, %v743
        %v786 = vpack.c.b16 %v750, %v744
        %v787 = vpack.c.b16 %v757, %v751
        %v788 = vpack.c.b16 %v758, %v752
        %v789 = vpack.c.b16 %v759, %v753
        %v790 = vpack.c.b16 %v760, %v754
        %v791 = vpack.c.b16 %v761, %v755
        %v792 = vpack.c.b16 %v762, %v756
        %v793 = vpack.c.b16 %v769, %v763
        %v794 = vpack.c.b16 %v770, %v764
        %v795 = vpack.c.b16 %v771, %v765
        %v796 = vpack.c.b16 %v772, %v766
        %v797 = vpack.c.b16 %v773, %v767
        %v798 = vpack.c.b16 %v774, %v768
        %v919 = vunpack.c.l.b16 %v607
        %v920 = vunpack.c.h.b16 %v607
        %v921 = vunpack.c.l.b16 %v608
        %v922 = vunpack.c.h.b16 %v608
        %v923 = vunpack.c.l.b16 %v609
        %v924 = vunpack.c.h.b16 %v609
        %v925 = vunpack.c.l.b16 %v610
        %v926 = vunpack.c.h.b16 %v610
        %v927 = vunpack.c.l.b16 %v611
        %v928 = vunpack.c.h.b16 %v611
        %v929 = vunpack.c.l.b16 %v612
        %v930 = vunpack.c.h.b16 %v612
        %v931 = vunpack.c.l.b16 %v613
        %v932 = vunpack.c.h.b16 %v613
        %v933 = vunpack.c.l.b16 %v614
        %v934 = vunpack.c.h.b16 %v614
        %v935 = vunpack.c.l.b16 %v615
        %v936 = vunpack.c.h.b16 %v615
        %v937 = vunpack.c.l.b16 %v616
        %v938 = vunpack.c.h.b16 %v616
        %v939 = vunpack.c.l.b16 %v617
        %v940 = vunpack.c.h.b16 %v617
        %v941 = vunpack.c.l.b16 %v618
        %v942 = vunpack.c.h.b16 %v618
        %v943 = vunpack.c.l.b16 %v619
        %v944 = vunpack.c.h.b16 %v619
        %v945 = vunpack.c.l.b16 %v620
        %v946 = vunpack.c.h.b16 %v620
        %v947 = vunpack.c.l.b16 %v621
        %v948 = vunpack.c.h.b16 %v621
        %v949 = vunpack.c.l.b16 %v622
        %v950 = vunpack.c.h.b16 %v622
        %v951 = vunpack.c.l.b16 %v623
        %v952 = vunpack.c.h.b16 %v623
        %v953 = vunpack.c.l.b16 %v624
        %v954 = vunpack.c.h.b16 %v624
        %v955 = vunpack.c.l.b16 %v625
        %v956 = vunpack.c.h.b16 %v625
        %v957 = vunpack.c.l.b16 %v626
        %v958 = vunpack.c.h.b16 %v626
        %v959 = vunpack.c.l.b16 %v627
        %v960 = vunpack.c.h.b16 %v627
        %v961 = vunpack.c.l.b16 %v628
        %v962 = vunpack.c.h.b16 %v628
        %v963 = vunpack.c.l.b16 %v629
        %v964 = vunpack.c.h.b16 %v629
        %v965 = vunpack.c.l.b16 %v630
        %v966 = vunpack.c.h.b16 %v630
        %v967 = vunpack.c.l.b16 %v631
        %v968 = vunpack.c.h.b16 %v631
        %v969 = vunpack.c.l.b16 %v632
        %v970 = vunpack.c.h.b16 %v632
        %v971 = vunpack.c.l.b16 %v633
        %v972 = vunpack.c.h.b16 %v633
        %v973 = vunpack.c.l.b16 %v634
        %v974 = vunpack.c.h.b16 %v634
        %v975 = vunpack.c.l.b16 %v635
        %v976 = vunpack.c.h.b16 %v635
        %v977 = vunpack.c.l.b16 %v636
        %v978 = vunpack.c.h.b16 %v636
        %v979 = vunpack.c.l.b16 %v637
        %v980 = vunpack.c.h.b16 %v637
        %v981 = vunpack.c.l.b16 %v638
        %v982 = vunpack.c.h.b16 %v638
        %v983 = vunpack.c.l.b16 %v639
        %v984 = vunpack.c.h.b16 %v639
        %v985 = vunpack.c.l.b16 %v640
        %v986 = vunpack.c.h.b16 %v640
        %v987 = vunpack.c.l.b16 %v641
        %v988 = vunpack.c.h.b16 %v641
        %v989 = vunpack.c.l.b16 %v642
        %v990 = vunpack.c.h.b16 %v642
        %v991 = vunpack.c.l.b16 %v643
        %v992 = vunpack.c.h.b16 %v643
        %v993 = vunpack.c.l.b16 %v644
        %v994 = vunpack.c.h.b16 %v644
        %v995 = vunpack.c.l.b16 %v645
        %v996 = vunpack.c.h.b16 %v645
        %v997 = vunpack.c.l.b16 %v646
        %v998 = vunpack.c.h.b16 %v646
        %v999 = vunpack.c.l.b16 %v647
        %v1000 = vunpack.c.h.b16 %v647
        %v1001 = vunpack.c.l.b16 %v648
        %v1002 = vunpack.c.h.b16 %v648
        %v1003 = vunpack.c.l.b16 %v649
        %v1004 = vunpack.c.h.b16 %v649
        %v1005 = vunpack.c.l.b16 %v650
        %v1006 = vunpack.c.h.b16 %v650
        %v1007 = vunpack.c.l.b16 %v651
        %v1008 = vunpack.c.h.b16 %v651
        %v1009 = vunpack.c.l.b16 %v652
        %v1010 = vunpack.c.h.b16 %v652
        %v1011 = vunpack.c.l.b16 %v653
        %v1012 = vunpack.c.h.b16 %v653
        %v1013 = vunpack.c.l.b16 %v654
        %v1014 = vunpack.c.h.b16 %v654
        %v1015 = vunpack.c.l.b16 %v655
        %v1016 = vunpack.c.h.b16 %v655
        %v1017 = vunpack.c.l.b16 %v656
        %v1018 = vunpack.c.h.b16 %v656
        %v1019 = vunpack.c.l.b16 %v657
        %v1020 = vunpack.c.h.b16 %v657
        %v1021 = vunpack.c.l.b16 %v658
        %v1022 = vunpack.c.h.b16 %v658
        %v1023 = vunpack.c.l.b16 %v659
        %v1024 = vunpack.c.h.b16 %v659
        %v1025 = vunpack.c.l.b16 %v660
        %v1026 = vunpack.c.h.b16 %v660
        %v1027 = vunpack.c.l.b16 %v661
        %v1028 = vunpack.c.h.b16 %v661
        %v1029 = vunpack.c.l.b16 %v662
        %v1030 = vunpack.c.h.b16 %v662
        %v1031 = vunpack.c.l.b16 %v663
        %v1032 = vunpack.c.h.b16 %v663
        %v1033 = vunpack.c.l.b16 %v664
        %v1034 = vunpack.c.h.b16 %v664
        %v1035 = vunpack.c.l.b16 %v665
        %v1036 = vunpack.c.h.b16 %v665
        %v1037 = vunpack.c.l.b16 %v666
        %v1038 = vunpack.c.h.b16 %v666
        %v1039 = vunpack.c.l.b16 %v667
        %v1040 = vunpack.c.h.b16 %v667
        %v1041 = vunpack.c.l.b16 %v668
        %v1042 = vunpack.c.h.b16 %v668
        %v1043 = vunpack.c.l.b16 %v669
        %v1044 = vunpack.c.h.b16 %v669
        %v1045 = vunpack.c.l.b16 %v670
        %v1046 = vunpack.c.h.b16 %v670
        %v1047 = vunpack.c.l.b16 %v671
        %v1048 = vunpack.c.h.b16 %v671
        %v1049 = vunpack.c.l.b16 %v672
        %v1050 = vunpack.c.h.b16 %v672
        %v1051 = vunpack.c.l.b16 %v673
        %v1052 = vunpack.c.h.b16 %v673
        %v1053 = vunpack.c.l.b16 %v674
        %v1054 = vunpack.c.h.b16 %v674
        %v1055 = vunpack.c.l.b16 %v675
        %v1056 = vunpack.c.h.b16 %v675
        %v1057 = vunpack.c.l.b16 %v676
        %v1058 = vunpack.c.h.b16 %v676
        %v1059 = vunpack.c.l.b16 %v677
        %v1060 = vunpack.c.h.b16 %v677
        %v1061 = vunpack.c.l.b16 %v678
        %v1062 = vunpack.c.h.b16 %v678
        %v1063 = vunpack.c.l.b16 %v679
        %v1064 = vunpack.c.h.b16 %v679
        %v1065 = vunpack.c.l.b16 %v680
        %v1066 = vunpack.c.h.b16 %v680
        %v1067 = vunpack.c.l.b16 %v681
        %v1068 = vunpack.c.h.b16 %v681
        %v1069 = vunpack.c.l.b16 %v682
        %v1070 = vunpack.c.h.b16 %v682
        %v1071 = vunpack.c.l.b16 %v683
        %v1072 = vunpack.c.h.b16 %v683
        %v1073 = vunpack.c.l.b16 %v684
        %v1074 = vunpack.c.h.b16 %v684
        %v1075 = vunpack.c.l.b16 %v685
        %v1076 = vunpack.c.h.b16 %v685
        %v1077 = vunpack.c.l.b16 %v686
        %v1078 = vunpack.c.h.b16 %v686
        %v1079 = vunpack.c.l.b16 %v687
        %v1080 = vunpack.c.h.b16 %v687
        %v1081 = vunpack.c.l.b16 %v688
        %v1082 = vunpack.c.h.b16 %v688
        %v1083 = vunpack.c.l.b16 %v689
        %v1084 = vunpack.c.h.b16 %v689
        %v1085 = vunpack.c.l.b16 %v690
        %v1086 = vunpack.c.h.b16 %v690
        %v1087 = vunpack.c.l.b16 %v691
        %v1088 = vunpack.c.h.b16 %v691
        %v1089 = vunpack.c.l.b16 %v692
        %v1090 = vunpack.c.h.b16 %v692
        %v1091 = vunpack.c.l.b16 %v693
        %v1092 = vunpack.c.h.b16 %v693
        %v1093 = vunpack.c.l.b16 %v694
        %v1094 = vunpack.c.h.b16 %v694
        %v1095 = vunpack.c.l.b16 %v695
        %v1096 = vunpack.c.h.b16 %v695
        %v1097 = vunpack.c.l.b16 %v696
        %v1098 = vunpack.c.h.b16 %v696
        %v1099 = vunpack.c.l.b16 %v697
        %v1100 = vunpack.c.h.b16 %v697
        %v1101 = vunpack.c.l.b16 %v698
        %v1102 = vunpack.c.h.b16 %v698
        %v1103 = vunpack.c.l.b16 %v699
        %v1104 = vunpack.c.h.b16 %v699
        %v1105 = vunpack.c.l.b16 %v700
        %v1106 = vunpack.c.h.b16 %v700
        %v1107 = vunpack.c.l.b16 %v701
        %v1108 = vunpack.c.h.b16 %v701
        %v1109 = vunpack.c.l.b16 %v702
        %v1110 = vunpack.c.h.b16 %v702
        %v1111 = vpack.c.b16 %v921, %v919
        %v1112 = vpack.c.b16 %v922, %v920
        %v1113 = vpack.c.b16 %v925, %v923
        %v1114 = vpack.c.b16 %v926, %v924
        %v1115 = vpack.c.b16 %v929, %v927
        %v1116 = vpack.c.b16 %v930, %v928
        %v1117 = vpack.c.b16 %v933, %v931
        %v1118 = vpack.c.b16 %v934, %v932
        %v1119 = vpack.c.b16 %v937, %v935
        %v1120 = vpack.c.b16 %v938, %v936
        %v1121 = vpack.c.b16 %v941, %v939
        %v1122 = vpack.c.b16 %v942, %v940
        %v1123 = vpack.c.b16 %v945, %v943
        %v1124 = vpack.c.b16 %v946, %v944
        %v1125 = vpack.c.b16 %v949, %v947
        %v1126 = vpack.c.b16 %v950, %v948
        %v1127 = vpack.c.b16 %v953, %v951
        %v1128 = vpack.c.b16 %v954, %v952
        %v1129 = vpack.c.b16 %v957, %v955
        %v1130 = vpack.c.b16 %v958, %v956
        %v1131 = vpack.c.b16 %v961, %v959
        %v1132 = vpack.c.b16 %v962, %v960
        %v1133 = vpack.c.b16 %v965, %v963
        %v1134 = vpack.c.b16 %v966, %v964
        %v1135 = vpack.c.b16 %v969, %v967
        %v1136 = vpack.c.b16 %v970, %v968
        %v1137 = vpack.c.b16 %v973, %v971
        %v1138 = vpack.c.b16 %v974, %v972
        %v1139 = vpack.c.b16 %v977, %v975
        %v1140 = vpack.c.b16 %v978, %v976
        %v1141 = vpack.c.b16 %v981, %v979
        %v1142 = vpack.c.b16 %v982, %v980
        %v1143 = vpack.c.b16 %v985, %v983
        %v1144 = vpack.c.b16 %v986, %v984
        %v1145 = vpack.c.b16 %v989, %v987
        %v1146 = vpack.c.b16 %v990, %v988
        %v1147 = vpack.c.b16 %v993, %v991
        %v1148 = vpack.c.b16 %v994, %v992
        %v1149 = vpack.c.b16 %v997, %v995
        %v1150 = vpack.c.b16 %v998, %v996
        %v1151 = vpack.c.b16 %v1001, %v999
        %v1152 = vpack.c.b16 %v1002, %v1000
        %v1153 = vpack.c.b16 %v1005, %v1003
        %v1154 = vpack.c.b16 %v1006, %v1004
        %v1155 = vpack.c.b16 %v1009, %v1007
        %v1156 = vpack.c.b16 %v1010, %v1008
        %v1157 = vpack.c.b16 %v1013, %v1011
        %v1158 = vpack.c.b16 %v1014, %v1012
        %v1159 = vpack.c.b16 %v1017, %v1015
        %v1160 = vpack.c.b16 %v1018, %v1016
        %v1161 = vpack.c.b16 %v1021, %v1019
        %v1162 = vpack.c.b16 %v1022, %v1020
        %v1163 = vpack.c.b16 %v1025, %v1023
        %v1164 = vpack.c.b16 %v1026, %v1024
        %v1165 = vpack.c.b16 %v1029, %v1027
        %v1166 = vpack.c.b16 %v1030, %v1028
        %v1167 = vpack.c.b16 %v1033, %v1031
        %v1168 = vpack.c.b16 %v1034, %v1032
        %v1169 = vpack.c.b16 %v1037, %v1035
        %v1170 = vpack.c.b16 %v1038, %v1036
        %v1171 = vpack.c.b16 %v1041, %v1039
        %v1172 = vpack.c.b16 %v1042, %v1040
        %v1173 = vpack.c.b16 %v1045, %v1043
        %v1174 = vpack.c.b16 %v1046, %v1044
        %v1175 = vpack.c.b16 %v1049, %v1047
        %v1176 = vpack.c.b16 %v1050, %v1048
        %v1177 = vpack.c.b16 %v1053, %v1051
        %v1178 = vpack.c.b16 %v1054, %v1052
        %v1179 = vpack.c.b16 %v1057, %v1055
        %v1180 = vpack.c.b16 %v1058, %v1056
        %v1181 = vpack.c.b16 %v1061, %v1059
        %v1182 = vpack.c.b16 %v1062, %v1060
        %v1183 = vpack.c.b16 %v1065, %v1063
        %v1184 = vpack.c.b16 %v1066, %v1064
        %v1185 = vpack.c.b16 %v1069, %v1067
        %v1186 = vpack.c.b16 %v1070, %v1068
        %v1187 = vpack.c.b16 %v1073, %v1071
        %v1188 = vpack.c.b16 %v1074, %v1072
        %v1189 = vpack.c.b16 %v1077, %v1075
        %v1190 = vpack.c.b16 %v1078, %v1076
        %v1191 = vpack.c.b16 %v1081, %v1079
        %v1192 = vpack.c.b16 %v1082, %v1080
        %v1193 = vpack.c.b16 %v1085, %v1083
        %v1194 = vpack.c.b16 %v1086, %v1084
        %v1195 = vpack.c.b16 %v1089, %v1087
        %v1196 = vpack.c.b16 %v1090, %v1088
        %v1197 = vpack.c.b16 %v1093, %v1091
        %v1198 = vpack.c.b16 %v1094, %v1092
        %v1199 = vpack.c.b16 %v1097, %v1095
        %v1200 = vpack.c.b16 %v1098, %v1096
        %v1201 = vpack.c.b16 %v1101, %v1099
        %v1202 = vpack.c.b16 %v1102, %v1100
        %v1203 = vpack.c.b16 %v1105, %v1103
        %v1204 = vpack.c.b16 %v1106, %v1104
        %v1205 = vpack.c.b16 %v1109, %v1107
        %v1206 = vpack.c.b16 %v1110, %v1108
        %1303 = vmatpush.bf16.msra.mxu0 %v1125
        %1304 = vmatpush.bf16.msra.mxu0 %v1123
        %1305 = vmatpush.bf16.msra.mxu0 %v1121
        %1306 = vmatpush.bf16.msra.mxu0 %v1119
        %1307 = vmatpush.bf16.msra.mxu0 %v1117
        %1308 = vmatpush.bf16.msra.mxu0 %v1115
        %1309 = vmatpush.bf16.msra.mxu0 %v1113
        %1310 = vmatpush.bf16.msra.mxu0 %v1111
        %1311 = vmatmul.bf16.gmra.mxu0 %v775
        %v1312 = vpop.f32.mrf.mxu0
        %v1313 = vadd.f32 0.0, %v1312
        %v1314 = vpop.f32.mrf.mxu0
        %v1315 = vadd.f32 0.0, %v1314
        %1316 = vmatmul.bf16.gmra.mxu0 %v781
        %v1317 = vpop.f32.mrf.mxu0
        %v1318 = vadd.f32 0.0, %v1317
        %v1319 = vpop.f32.mrf.mxu0
        %v1320 = vadd.f32 0.0, %v1319
        %1321 = vmatmul.bf16.gmra.mxu0 %v787
        %v1322 = vpop.f32.mrf.mxu0
        %v1323 = vadd.f32 0.0, %v1322
        %v1324 = vpop.f32.mrf.mxu0
        %v1325 = vadd.f32 0.0, %v1324
        %1326 = vmatmul.bf16.gmra.mxu0 %v793
        %v1327 = vpop.f32.mrf.mxu0
        %v1328 = vadd.f32 0.0, %v1327
        %v1329 = vpop.f32.mrf.mxu0
        %v1330 = vadd.f32 0.0, %v1329
        %1331 = vdwg.mxu0
        %1332 = vmatpush.bf16.msra.mxu0 %v1141
        %1333 = vmatpush.bf16.msra.mxu0 %v1139
        %1334 = vmatpush.bf16.msra.mxu0 %v1137
        %1335 = vmatpush.bf16.msra.mxu0 %v1135
        %1336 = vmatpush.bf16.msra.mxu0 %v1133
        %1337 = vmatpush.bf16.msra.mxu0 %v1131
        %1338 = vmatpush.bf16.msra.mxu0 %v1129
        %1339 = vmatpush.bf16.msra.mxu0 %v1127
        %1340 = vmatmul.bf16.gmra.mxu0 %v776
        %v1341 = vpop.f32.mrf.mxu0
        %v1342 = vadd.f32 %v1313, %v1341
        %v1343 = vpop.f32.mrf.mxu0
        %v1344 = vadd.f32 %v1315, %v1343
        %1345 = vmatmul.bf16.gmra.mxu0 %v782
        %v1346 = vpop.f32.mrf.mxu0
        %v1347 = vadd.f32 %v1318, %v1346
        %v1348 = vpop.f32.mrf.mxu0
        %v1349 = vadd.f32 %v1320, %v1348
        %1350 = vmatmul.bf16.gmra.mxu0 %v788
        %v1351 = vpop.f32.mrf.mxu0
        %v1352 = vadd.f32 %v1323, %v1351
        %v1353 = vpop.f32.mrf.mxu0
        %v1354 = vadd.f32 %v1325, %v1353
        %1355 = vmatmul.bf16.gmra.mxu0 %v794
        %v1356 = vpop.f32.mrf.mxu0
        %v1357 = vadd.f32 %v1328, %v1356
        %v1358 = vpop.f32.mrf.mxu0
        %v1359 = vadd.f32 %v1330, %v1358
        %1360 = vdwg.mxu0
        %1361 = vmatpush.bf16.msra.mxu0 %v1157
        %1362 = vmatpush.bf16.msra.mxu0 %v1155
        %1363 = vmatpush.bf16.msra.mxu0 %v1153
        %1364 = vmatpush.bf16.msra.mxu0 %v1151
        %1365 = vmatpush.bf16.msra.mxu0 %v1149
        %1366 = vmatpush.bf16.msra.mxu0 %v1147
        %1367 = vmatpush.bf16.msra.mxu0 %v1145
        %1368 = vmatpush.bf16.msra.mxu0 %v1143
        %1369 = vmatmul.bf16.gmra.mxu0 %v777
        %v1370 = vpop.f32.mrf.mxu0
        %v1371 = vadd.f32 %v1342, %v1370
        %v1372 = vpop.f32.mrf.mxu0
        %v1373 = vadd.f32 %v1344, %v1372
        %1374 = vmatmul.bf16.gmra.mxu0 %v783
        %v1375 = vpop.f32.mrf.mxu0
        %v1376 = vadd.f32 %v1347, %v1375
        %v1377 = vpop.f32.mrf.mxu0
        %v1378 = vadd.f32 %v1349, %v1377
        %1379 = vmatmul.bf16.gmra.mxu0 %v789
        %v1380 = vpop.f32.mrf.mxu0
        %v1381 = vadd.f32 %v1352, %v1380
        %v1382 = vpop.f32.mrf.mxu0
        %v1383 = vadd.f32 %v1354, %v1382
        %1384 = vmatmul.bf16.gmra.mxu0 %v795
        %v1385 = vpop.f32.mrf.mxu0
        %v1386 = vadd.f32 %v1357, %v1385
        %v1387 = vpop.f32.mrf.mxu0
        %v1388 = vadd.f32 %v1359, %v1387
        %1389 = vdwg.mxu0
        %1390 = vmatpush.bf16.msra.mxu0 %v1173
        %1391 = vmatpush.bf16.msra.mxu0 %v1171
        %1392 = vmatpush.bf16.msra.mxu0 %v1169
        %1393 = vmatpush.bf16.msra.mxu0 %v1167
        %1394 = vmatpush.bf16.msra.mxu0 %v1165
        %1395 = vmatpush.bf16.msra.mxu0 %v1163
        %1396 = vmatpush.bf16.msra.mxu0 %v1161
        %1397 = vmatpush.bf16.msra.mxu0 %v1159
        %1398 = vmatmul.bf16.gmra.mxu0 %v778
        %v1399 = vpop.f32.mrf.mxu0
        %v1400 = vadd.f32 %v1371, %v1399
        %v1401 = vpop.f32.mrf.mxu0
        %v1402 = vadd.f32 %v1373, %v1401
        %1403 = vmatmul.bf16.gmra.mxu0 %v784
        %v1404 = vpop.f32.mrf.mxu0
        %v1405 = vadd.f32 %v1376, %v1404
        %v1406 = vpop.f32.mrf.mxu0
        %v1407 = vadd.f32 %v1378, %v1406
        %1408 = vmatmul.bf16.gmra.mxu0 %v790
        %v1409 = vpop.f32.mrf.mxu0
        %v1410 = vadd.f32 %v1381, %v1409
        %v1411 = vpop.f32.mrf.mxu0
        %v1412 = vadd.f32 %v1383, %v1411
        %1413 = vmatmul.bf16.gmra.mxu0 %v796
        %v1414 = vpop.f32.mrf.mxu0
        %v1415 = vadd.f32 %v1386, %v1414
        %v1416 = vpop.f32.mrf.mxu0
        %v1417 = vadd.f32 %v1388, %v1416
        %1418 = vdwg.mxu0
        %1419 = vmatpush.bf16.msra.mxu0 %v1189
        %1420 = vmatpush.bf16.msra.mxu0 %v1187
        %1421 = vmatpush.bf16.msra.mxu0 %v1185
        %1422 = vmatpush.bf16.msra.mxu0 %v1183
        %1423 = vmatpush.bf16.msra.mxu0 %v1181
        %1424 = vmatpush.bf16.msra.mxu0 %v1179
        %1425 = vmatpush.bf16.msra.mxu0 %v1177
        %1426 = vmatpush.bf16.msra.mxu0 %v1175
        %1427 = vmatmul.bf16.gmra.mxu0 %v779
        %v1428 = vpop.f32.mrf.mxu0
        %v1429 = vadd.f32 %v1400, %v1428
        %v1430 = vpop.f32.mrf.mxu0
        %v1431 = vadd.f32 %v1402, %v1430
        %1432 = vmatmul.bf16.gmra.mxu0 %v785
        %v1433 = vpop.f32.mrf.mxu0
        %v1434 = vadd.f32 %v1405, %v1433
        %v1435 = vpop.f32.mrf.mxu0
        %v1436 = vadd.f32 %v1407, %v1435
        %1437 = vmatmul.bf16.gmra.mxu0 %v791
        %v1438 = vpop.f32.mrf.mxu0
        %v1439 = vadd.f32 %v1410, %v1438
        %v1440 = vpop.f32.mrf.mxu0
        %v1441 = vadd.f32 %v1412, %v1440
        %1442 = vmatmul.bf16.gmra.mxu0 %v797
        %v1443 = vpop.f32.mrf.mxu0
        %v1444 = vadd.f32 %v1415, %v1443
        %v1445 = vpop.f32.mrf.mxu0
        %v1446 = vadd.f32 %v1417, %v1445
        %1447 = vdwg.mxu0
        %1448 = vmatpush.bf16.msra.mxu0 %v1205
        %1449 = vmatpush.bf16.msra.mxu0 %v1203
        %1450 = vmatpush.bf16.msra.mxu0 %v1201
        %1451 = vmatpush.bf16.msra.mxu0 %v1199
        %1452 = vmatpush.bf16.msra.mxu0 %v1197
        %1453 = vmatpush.bf16.msra.mxu0 %v1195
        %1454 = vmatpush.bf16.msra.mxu0 %v1193
        %1455 = vmatpush.bf16.msra.mxu0 %v1191
        %1456 = vmatmul.bf16.gmra.mxu0 %v780
        %v1457 = vpop.f32.mrf.mxu0
        %v1458 = vadd.f32 %v1429, %v1457
        %v1459 = vpop.f32.mrf.mxu0
        %v1460 = vadd.f32 %v1431, %v1459
        %1461 = vmatmul.bf16.gmra.mxu0 %v786
        %v1462 = vpop.f32.mrf.mxu0
        %v1463 = vadd.f32 %v1434, %v1462
        %v1464 = vpop.f32.mrf.mxu0
        %v1465 = vadd.f32 %v1436, %v1464
        %1466 = vmatmul.bf16.gmra.mxu0 %v792
        %v1467 = vpop.f32.mrf.mxu0
        %v1468 = vadd.f32 %v1439, %v1467
        %v1469 = vpop.f32.mrf.mxu0
        %v1470 = vadd.f32 %v1441, %v1469
        %1471 = vmatmul.bf16.gmra.mxu0 %v798
        %v1472 = vpop.f32.mrf.mxu0
        %v1473 = vadd.f32 %v1444, %v1472
        %v1474 = vpop.f32.mrf.mxu0
        %v1475 = vadd.f32 %v1446, %v1474
        %1476 = vdwg.mxu0
        %1477 = vmatpush.bf16.msra.mxu0 %v1126
        %1478 = vmatpush.bf16.msra.mxu0 %v1124
        %1479 = vmatpush.bf16.msra.mxu0 %v1122
        %1480 = vmatpush.bf16.msra.mxu0 %v1120
        %1481 = vmatpush.bf16.msra.mxu0 %v1118
        %1482 = vmatpush.bf16.msra.mxu0 %v1116
        %1483 = vmatpush.bf16.msra.mxu0 %v1114
        %1484 = vmatpush.bf16.msra.mxu0 %v1112
        %1485 = vmatmul.bf16.gmra.mxu0 %v775
        %v1486 = vpop.f32.mrf.mxu0
        %v1487 = vadd.f32 0.0, %v1486
        %v1488 = vpop.f32.mrf.mxu0
        %v1489 = vadd.f32 0.0, %v1488
        %1490 = vmatmul.bf16.gmra.mxu0 %v781
        %v1491 = vpop.f32.mrf.mxu0
        %v1492 = vadd.f32 0.0, %v1491
        %v1493 = vpop.f32.mrf.mxu0
        %v1494 = vadd.f32 0.0, %v1493
        %1495 = vmatmul.bf16.gmra.mxu0 %v787
        %v1496 = vpop.f32.mrf.mxu0
        %v1497 = vadd.f32 0.0, %v1496
        %v1498 = vpop.f32.mrf.mxu0
        %v1499 = vadd.f32 0.0, %v1498
        %1500 = vmatmul.bf16.gmra.mxu0 %v793
        %v1501 = vpop.f32.mrf.mxu0
        %v1502 = vadd.f32 0.0, %v1501
        %v1503 = vpop.f32.mrf.mxu0
        %v1504 = vadd.f32 0.0, %v1503
        %1505 = vdwg.mxu0
        %1506 = vmatpush.bf16.msra.mxu0 %v1142
        %1507 = vmatpush.bf16.msra.mxu0 %v1140
        %1508 = vmatpush.bf16.msra.mxu0 %v1138
        %1509 = vmatpush.bf16.msra.mxu0 %v1136
        %1510 = vmatpush.bf16.msra.mxu0 %v1134
        %1511 = vmatpush.bf16.msra.mxu0 %v1132
        %1512 = vmatpush.bf16.msra.mxu0 %v1130
        %1513 = vmatpush.bf16.msra.mxu0 %v1128
        %1514 = vmatmul.bf16.gmra.mxu0 %v776
        %v1515 = vpop.f32.mrf.mxu0
        %v1516 = vadd.f32 %v1487, %v1515
        %v1517 = vpop.f32.mrf.mxu0
        %v1518 = vadd.f32 %v1489, %v1517
        %1519 = vmatmul.bf16.gmra.mxu0 %v782
        %v1520 = vpop.f32.mrf.mxu0
        %v1521 = vadd.f32 %v1492, %v1520
        %v1522 = vpop.f32.mrf.mxu0
        %v1523 = vadd.f32 %v1494, %v1522
        %1524 = vmatmul.bf16.gmra.mxu0 %v788
        %v1525 = vpop.f32.mrf.mxu0
        %v1526 = vadd.f32 %v1497, %v1525
        %v1527 = vpop.f32.mrf.mxu0
        %v1528 = vadd.f32 %v1499, %v1527
        %1529 = vmatmul.bf16.gmra.mxu0 %v794
        %v1530 = vpop.f32.mrf.mxu0
        %v1531 = vadd.f32 %v1502, %v1530
        %v1532 = vpop.f32.mrf.mxu0
        %v1533 = vadd.f32 %v1504, %v1532
        %1534 = vdwg.mxu0
        %1535 = vmatpush.bf16.msra.mxu0 %v1158
        %1536 = vmatpush.bf16.msra.mxu0 %v1156
        %1537 = vmatpush.bf16.msra.mxu0 %v1154
        %1538 = vmatpush.bf16.msra.mxu0 %v1152
        %1539 = vmatpush.bf16.msra.mxu0 %v1150
        %1540 = vmatpush.bf16.msra.mxu0 %v1148
        %1541 = vmatpush.bf16.msra.mxu0 %v1146
        %1542 = vmatpush.bf16.msra.mxu0 %v1144
        %1543 = vmatmul.bf16.gmra.mxu0 %v777
        %v1544 = vpop.f32.mrf.mxu0
        %v1545 = vadd.f32 %v1516, %v1544
        %v1546 = vpop.f32.mrf.mxu0
        %v1547 = vadd.f32 %v1518, %v1546
        %1548 = vmatmul.bf16.gmra.mxu0 %v783
        %v1549 = vpop.f32.mrf.mxu0
        %v1550 = vadd.f32 %v1521, %v1549
        %v1551 = vpop.f32.mrf.mxu0
        %v1552 = vadd.f32 %v1523, %v1551
        %1553 = vmatmul.bf16.gmra.mxu0 %v789
        %v1554 = vpop.f32.mrf.mxu0
        %v1555 = vadd.f32 %v1526, %v1554
        %v1556 = vpop.f32.mrf.mxu0
        %v1557 = vadd.f32 %v1528, %v1556
        %1558 = vmatmul.bf16.gmra.mxu0 %v795
        %v1559 = vpop.f32.mrf.mxu0
        %v1560 = vadd.f32 %v1531, %v1559
        %v1561 = vpop.f32.mrf.mxu0
        %v1562 = vadd.f32 %v1533, %v1561
        %1563 = vdwg.mxu0
        %1564 = vmatpush.bf16.msra.mxu0 %v1174
        %1565 = vmatpush.bf16.msra.mxu0 %v1172
        %1566 = vmatpush.bf16.msra.mxu0 %v1170
        %1567 = vmatpush.bf16.msra.mxu0 %v1168
        %1568 = vmatpush.bf16.msra.mxu0 %v1166
        %1569 = vmatpush.bf16.msra.mxu0 %v1164
        %1570 = vmatpush.bf16.msra.mxu0 %v1162
        %1571 = vmatpush.bf16.msra.mxu0 %v1160
        %1572 = vmatmul.bf16.gmra.mxu0 %v778
        %v1573 = vpop.f32.mrf.mxu0
        %v1574 = vadd.f32 %v1545, %v1573
        %v1575 = vpop.f32.mrf.mxu0
        %v1576 = vadd.f32 %v1547, %v1575
        %1577 = vmatmul.bf16.gmra.mxu0 %v784
        %v1578 = vpop.f32.mrf.mxu0
        %v1579 = vadd.f32 %v1550, %v1578
        %v1580 = vpop.f32.mrf.mxu0
        %v1581 = vadd.f32 %v1552, %v1580
        %1582 = vmatmul.bf16.gmra.mxu0 %v790
        %v1583 = vpop.f32.mrf.mxu0
        %v1584 = vadd.f32 %v1555, %v1583
        %v1585 = vpop.f32.mrf.mxu0
        %v1586 = vadd.f32 %v1557, %v1585
        %1587 = vmatmul.bf16.gmra.mxu0 %v796
        %v1588 = vpop.f32.mrf.mxu0
        %v1589 = vadd.f32 %v1560, %v1588
        %v1590 = vpop.f32.mrf.mxu0
        %v1591 = vadd.f32 %v1562, %v1590
        %1592 = vdwg.mxu0
        %1593 = vmatpush.bf16.msra.mxu0 %v1190
        %1594 = vmatpush.bf16.msra.mxu0 %v1188
        %1595 = vmatpush.bf16.msra.mxu0 %v1186
        %1596 = vmatpush.bf16.msra.mxu0 %v1184
        %1597 = vmatpush.bf16.msra.mxu0 %v1182
        %1598 = vmatpush.bf16.msra.mxu0 %v1180
        %1599 = vmatpush.bf16.msra.mxu0 %v1178
        %1600 = vmatpush.bf16.msra.mxu0 %v1176
        %1601 = vmatmul.bf16.gmra.mxu0 %v779
        %v1602 = vpop.f32.mrf.mxu0
        %v1603 = vadd.f32 %v1574, %v1602
        %v1604 = vpop.f32.mrf.mxu0
        %v1605 = vadd.f32 %v1576, %v1604
        %1606 = vmatmul.bf16.gmra.mxu0 %v785
        %v1607 = vpop.f32.mrf.mxu0
        %v1608 = vadd.f32 %v1579, %v1607
        %v1609 = vpop.f32.mrf.mxu0
        %v1610 = vadd.f32 %v1581, %v1609
        %1611 = vmatmul.bf16.gmra.mxu0 %v791
        %v1612 = vpop.f32.mrf.mxu0
        %v1613 = vadd.f32 %v1584, %v1612
        %v1614 = vpop.f32.mrf.mxu0
        %v1615 = vadd.f32 %v1586, %v1614
        %1616 = vmatmul.bf16.gmra.mxu0 %v797
        %v1617 = vpop.f32.mrf.mxu0
        %v1618 = vadd.f32 %v1589, %v1617
        %v1619 = vpop.f32.mrf.mxu0
        %v1620 = vadd.f32 %v1591, %v1619
        %1621 = vdwg.mxu0
        %1622 = vmatpush.bf16.msra.mxu0 %v1206
        %1623 = vmatpush.bf16.msra.mxu0 %v1204
        %1624 = vmatpush.bf16.msra.mxu0 %v1202
        %1625 = vmatpush.bf16.msra.mxu0 %v1200
        %1626 = vmatpush.bf16.msra.mxu0 %v1198
        %1627 = vmatpush.bf16.msra.mxu0 %v1196
        %1628 = vmatpush.bf16.msra.mxu0 %v1194
        %1629 = vmatpush.bf16.msra.mxu0 %v1192
        %1630 = vmatmul.bf16.gmra.mxu0 %v780
        %v1631 = vpop.f32.mrf.mxu0
        %v1632 = vadd.f32 %v1603, %v1631
        %v1633 = vpop.f32.mrf.mxu0
        %v1634 = vadd.f32 %v1605, %v1633
        %1635 = vmatmul.bf16.gmra.mxu0 %v786
        %v1636 = vpop.f32.mrf.mxu0
        %v1637 = vadd.f32 %v1608, %v1636
        %v1638 = vpop.f32.mrf.mxu0
        %v1639 = vadd.f32 %v1610, %v1638
        %1640 = vmatmul.bf16.gmra.mxu0 %v792
        %v1641 = vpop.f32.mrf.mxu0
        %v1642 = vadd.f32 %v1613, %v1641
        %v1643 = vpop.f32.mrf.mxu0
        %v1644 = vadd.f32 %v1615, %v1643
        %1645 = vmatmul.bf16.gmra.mxu0 %v798
        %v1646 = vpop.f32.mrf.mxu0
        %v1647 = vadd.f32 %v1618, %v1646
        %v1648 = vpop.f32.mrf.mxu0
        %v1649 = vadd.f32 %v1620, %v1648
        %1650 = vdwg.mxu0
        %v1651 = vld [vmem:[%s3] sm:$0x3]
        %v1653 = vperm.slane %v1651, 0
        %v1654 = vperm.slane %v1651, 1
        %v1657 = vmul.f32 %v1458, %v1653
        %v1658 = vmul.f32 %v1632, %v1654
        %v1659 = vmul.f32 %v1460, %v1653
        %v1660 = vmul.f32 %v1634, %v1654
        %v1661 = vmul.f32 %v1463, %v1653
        %v1662 = vmul.f32 %v1637, %v1654
        %v1663 = vmul.f32 %v1465, %v1653
        %v1664 = vmul.f32 %v1639, %v1654
        %v1665 = vmul.f32 %v1468, %v1653
        %v1666 = vmul.f32 %v1642, %v1654
        %v1667 = vmul.f32 %v1470, %v1653
        %v1668 = vmul.f32 %v1644, %v1654
        %v1669 = vmul.f32 %v1473, %v1653
        %v1670 = vmul.f32 %v1647, %v1654
        %v1671 = vmul.f32 %v1475, %v1653
        %v1672 = vmul.f32 %v1649, %v1654
        %v1673 = vld [vmem:[#allocation9] sm:$0x3]
        %v1675 = vperm.slane %v1673, 0
        %v1676 = vperm.slane %v1673, 1
        %v1679 = vadd.f32 %v1657, %v1675
        %v1680 = vadd.f32 %v1658, %v1676
        %v1681 = vadd.f32 %v1659, %v1675
        %v1682 = vadd.f32 %v1660, %v1676
        %v1683 = vadd.f32 %v1661, %v1675
        %v1684 = vadd.f32 %v1662, %v1676
        %v1685 = vadd.f32 %v1663, %v1675
        %v1686 = vadd.f32 %v1664, %v1676
        %v1687 = vadd.f32 %v1665, %v1675
        %v1688 = vadd.f32 %v1666, %v1676
        %v1689 = vadd.f32 %v1667, %v1675
        %v1690 = vadd.f32 %v1668, %v1676
        %v1691 = vadd.f32 %v1669, %v1675
        %v1692 = vadd.f32 %v1670, %v1676
        %v1693 = vadd.f32 %v1671, %v1675
        %v1694 = vadd.f32 %v1672, %v1676
        %v1695 = vmax.f32 %v1679, 0.0
        %v1696 = vmax.f32 %v1680, 0.0
        %v1697 = vmax.f32 %v1681, 0.0
        %v1698 = vmax.f32 %v1682, 0.0
        %v1699 = vmax.f32 %v1683, 0.0
        %v1700 = vmax.f32 %v1684, 0.0
        %v1701 = vmax.f32 %v1685, 0.0
        %v1702 = vmax.f32 %v1686, 0.0
        %v1703 = vmax.f32 %v1687, 0.0
        %v1704 = vmax.f32 %v1688, 0.0
        %v1705 = vmax.f32 %v1689, 0.0
        %v1706 = vmax.f32 %v1690, 0.0
        %v1707 = vmax.f32 %v1691, 0.0
        %v1708 = vmax.f32 %v1692, 0.0
        %v1709 = vmax.f32 %v1693, 0.0
        %v1710 = vmax.f32 %v1694, 0.0
        %v1711 = vpack.c.bf16 %v1696, %v1695
        %v1712 = vpack.c.bf16 %v1698, %v1697
        %v1713 = vpack.c.bf16 %v1700, %v1699
        %v1714 = vpack.c.bf16 %v1702, %v1701
        %v1715 = vpack.c.bf16 %v1704, %v1703
        %v1716 = vpack.c.bf16 %v1706, %v1705
        %v1717 = vpack.c.bf16 %v1708, %v1707
        %v1718 = vpack.c.bf16 %v1710, %v1709
        %v1719 = vld [vmem:[#allocation2] sm:$0x11]
        %v1720 = vsel %vm379, 0, %v1719
        %1721 = vst [vmem:[#allocation2] sm:$0x11] %v1720
        %v1722 = vld [vmem:[#allocation2 + $0x30] sm:$0x11]
        %v1723 = vsel %vm379, 0, %v1722
        %1724 = vst [vmem:[#allocation2 + $0x30] sm:$0x11] %v1723
        %v1725 = vld [vmem:[#allocation2 + $0x60] sm:$0x11]
        %v1726 = vsel %vm379, 0, %v1725
        %1727 = vst [vmem:[#allocation2 + $0x60] sm:$0x11] %v1726
        %v1728 = vld [vmem:[#allocation2 + $0x90] sm:$0x11]
        %v1729 = vsel %vm379, 0, %v1728
        %1730 = vst [vmem:[#allocation2 + $0x90] sm:$0x11] %v1729
        %v1732 = vshrl.u32 %v1711, 16
        %v1734 = vrot.slane %v1732, 7
        %v1735 = vshll.u32 %v1711, 16
        %v1737 = vor.u32 %v1734, %v1735
        %v1738 = vrot.slane %v1734, 4
        %v1740 = vshrl.u32 %v1712, 16
        %v1742 = vrot.slane %v1740, 7
        %v1743 = vshll.u32 %v1712, 16
        %v1745 = vor.u32 %v1742, %v1743
        %v1746 = vsel %vm393, %v1738, %v1745
        %v1748 = vshrl.u32 %v1713, 16
        %v1750 = vrot.slane %v1748, 7
        %v1751 = vshll.u32 %v1713, 16
        %v1753 = vor.u32 %v1750, %v1751
        %v1754 = vrot.slane %v1750, 4
        %v1756 = vshrl.u32 %v1714, 16
        %v1758 = vrot.slane %v1756, 7
        %v1759 = vshll.u32 %v1714, 16
        %v1761 = vor.u32 %v1758, %v1759
        %v1762 = vsel %vm393, %v1754, %v1761
        %v1764 = vshrl.u32 %v1715, 16
        %v1766 = vrot.slane %v1764, 7
        %v1767 = vshll.u32 %v1715, 16
        %v1769 = vor.u32 %v1766, %v1767
        %v1770 = vrot.slane %v1766, 4
        %v1772 = vshrl.u32 %v1716, 16
        %v1774 = vrot.slane %v1772, 7
        %v1775 = vshll.u32 %v1716, 16
        %v1777 = vor.u32 %v1774, %v1775
        %v1778 = vsel %vm393, %v1770, %v1777
        %v1780 = vshrl.u32 %v1717, 16
        %v1782 = vrot.slane %v1780, 7
        %v1783 = vshll.u32 %v1717, 16
        %v1785 = vor.u32 %v1782, %v1783
        %v1786 = vrot.slane %v1782, 4
        %v1788 = vshrl.u32 %v1718, 16
        %v1790 = vrot.slane %v1788, 7
        %v1791 = vshll.u32 %v1718, 16
        %v1793 = vor.u32 %v1790, %v1791
        %v1794 = vsel %vm393, %v1786, %v1793
        %v1803 = vld [vmem:[#allocation2] sm:$0xff]
        %v1804 = vsel %vm472, %v1737, %v1803
        %1805 = vst [vmem:[#allocation2] sm:$0xff] %v1804
        %1806 = vst [vmem:[#allocation2 + $0x18] sm:$0xff] %v1746
        %v1807 = vld [vmem:[#allocation2 + $0x30] sm:$0xff]
        %v1808 = vsel %vm472, %v1753, %v1807
        %1809 = vst [vmem:[#allocation2 + $0x30] sm:$0xff] %v1808
        %1810 = vst [vmem:[#allocation2 + $0x48] sm:$0xff] %v1762
        %v1811 = vld [vmem:[#allocation2 + $0x60] sm:$0xff]
        %v1812 = vsel %vm472, %v1769, %v1811
        %1813 = vst [vmem:[#allocation2 + $0x60] sm:$0xff] %v1812
        %1814 = vst [vmem:[#allocation2 + $0x78] sm:$0xff] %v1778
        %v1815 = vld [vmem:[#allocation2 + $0x90] sm:$0xff]
        %v1816 = vsel %vm472, %v1785, %v1815
        %1817 = vst [vmem:[#allocation2 + $0x90] sm:$0xff] %v1816
        %1818 = vst [vmem:[#allocation2 + $0xa8] sm:$0xff] %v1794
        %1819 = vst [vmem:[#allocation2 + $0x8] sm:$0xff] %v1711
        %1820 = vst [vmem:[#allocation2 + $0x20] sm:$0xff] %v1712
        %1821 = vst [vmem:[#allocation2 + $0x38] sm:$0xff] %v1713
        %1822 = vst [vmem:[#allocation2 + $0x50] sm:$0xff] %v1714
        %1823 = vst [vmem:[#allocation2 + $0x68] sm:$0xff] %v1715
        %1824 = vst [vmem:[#allocation2 + $0x80] sm:$0xff] %v1716
        %1825 = vst [vmem:[#allocation2 + $0x98] sm:$0xff] %v1717
        %1826 = vst [vmem:[#allocation2 + $0xb0] sm:$0xff] %v1718
        %v1827 = vrot.slane %v1732, 4
        %v1828 = vrot.slane %v1735, 5
        %v1829 = vor.u32 %v1827, %v1828
        %v1830 = vrot.slane %v1829, 4
        %v1831 = vrot.slane %v1743, 5
        %v1832 = vsel %vm499, %v1830, %v1831
        %v1833 = vrot.slane %v1740, 4
        %v1834 = vor.u32 %v1833, %v1831
        %v1835 = vrot.slane %v1834, 4
        %v1836 = vrot.slane %v1748, 4
        %v1837 = vrot.slane %v1751, 5
        %v1838 = vor.u32 %v1836, %v1837
        %v1839 = vrot.slane %v1838, 4
        %v1840 = vrot.slane %v1759, 5
        %v1841 = vsel %vm499, %v1839, %v1840
        %v1842 = vrot.slane %v1756, 4
        %v1843 = vor.u32 %v1842, %v1840
        %v1844 = vrot.slane %v1843, 4
        %v1845 = vrot.slane %v1764, 4
        %v1846 = vrot.slane %v1767, 5
        %v1847 = vor.u32 %v1845, %v1846
        %v1848 = vrot.slane %v1847, 4
        %v1849 = vrot.slane %v1775, 5
        %v1850 = vsel %vm499, %v1848, %v1849
        %v1851 = vrot.slane %v1772, 4
        %v1852 = vor.u32 %v1851, %v1849
        %v1853 = vrot.slane %v1852, 4
        %v1854 = vrot.slane %v1780, 4
        %v1855 = vrot.slane %v1783, 5
        %v1856 = vor.u32 %v1854, %v1855
        %v1857 = vrot.slane %v1856, 4
        %v1858 = vrot.slane %v1791, 5
        %v1859 = vsel %vm499, %v1857, %v1858
        %v1860 = vrot.slane %v1788, 4
        %v1861 = vor.u32 %v1860, %v1858
        %v1862 = vrot.slane %v1861, 4
        %1871 = vst [vmem:[#allocation2 + $0x10] sm:$0xff] %v1832
        %v1872 = vld [vmem:[#allocation2 + $0x28] sm:$0xff]
        %v1873 = vsel %vm548, %v1835, %v1872
        %1874 = vst [vmem:[#allocation2 + $0x28] sm:$0xff] %v1873
        %1875 = vst [vmem:[#allocation2 + $0x40] sm:$0xff] %v1841
        %v1876 = vld [vmem:[#allocation2 + $0x58] sm:$0xff]
        %v1877 = vsel %vm548, %v1844, %v1876
        %1878 = vst [vmem:[#allocation2 + $0x58] sm:$0xff] %v1877
        %1879 = vst [vmem:[#allocation2 + $0x70] sm:$0xff] %v1850
        %v1880 = vld [vmem:[#allocation2 + $0x88] sm:$0xff]
        %v1881 = vsel %vm548, %v1853, %v1880
        %1882 = vst [vmem:[#allocation2 + $0x88] sm:$0xff] %v1881
        %1883 = vst [vmem:[#allocation2 + $0xa0] sm:$0xff] %v1859
        %v1884 = vld [vmem:[#allocation2 + $0xb8] sm:$0xff]
        %v1885 = vsel %vm548, %v1862, %v1884
        %1886 = vst [vmem:[#allocation2 + $0xb8] sm:$0xff] %v1885
        %v1887 = vld [vmem:[#allocation2 + $0x28] sm:$0x88]
        %v1888 = vsel %vm570, 0, %v1887
        %1889 = vst [vmem:[#allocation2 + $0x28] sm:$0x88] %v1888
        %v1890 = vld [vmem:[#allocation2 + $0x58] sm:$0x88]
        %v1891 = vsel %vm570, 0, %v1890
        %1892 = vst [vmem:[#allocation2 + $0x58] sm:$0x88] %v1891
        %v1893 = vld [vmem:[#allocation2 + $0x88] sm:$0x88]
        %v1894 = vsel %vm570, 0, %v1893
        %1895 = vst [vmem:[#allocation2 + $0x88] sm:$0x88] %v1894
        %v1896 = vld [vmem:[#allocation2 + $0xb8] sm:$0x88]
        %v1897 = vsel %vm570, 0, %v1896
        %1898 = vst [vmem:[#allocation2 + $0xb8] sm:$0x88] %v1897
        %v1899 = vld [vmem:[#allocation2] sm:$0xff]
        %v1900 = vld [vmem:[#allocation2 + $0x8] sm:$0xff]
        %v1901 = vld [vmem:[#allocation2 + $0x10] sm:$0xff]
        %v1902 = vld [vmem:[#allocation2 + $0x18] sm:$0xff]
        %v1903 = vld [vmem:[#allocation2 + $0x20] sm:$0xff]
        %v1904 = vld [vmem:[#allocation2 + $0x28] sm:$0xff]
        %v1905 = vld [vmem:[#allocation2 + $0x30] sm:$0xff]
        %v1906 = vld [vmem:[#allocation2 + $0x38] sm:$0xff]
        %v1907 = vld [vmem:[#allocation2 + $0x40] sm:$0xff]
        %v1908 = vld [vmem:[#allocation2 + $0x48] sm:$0xff]
        %v1909 = vld [vmem:[#allocation2 + $0x50] sm:$0xff]
        %v1910 = vld [vmem:[#allocation2 + $0x58] sm:$0xff]
        %v1911 = vld [vmem:[#allocation2 + $0x60] sm:$0xff]
        %v1912 = vld [vmem:[#allocation2 + $0x68] sm:$0xff]
        %v1913 = vld [vmem:[#allocation2 + $0x70] sm:$0xff]
        %v1914 = vld [vmem:[#allocation2 + $0x78] sm:$0xff]
        %v1915 = vld [vmem:[#allocation2 + $0x80] sm:$0xff]
        %v1916 = vld [vmem:[#allocation2 + $0x88] sm:$0xff]
        %v1917 = vld [vmem:[#allocation2 + $0x90] sm:$0xff]
        %v1918 = vld [vmem:[#allocation2 + $0x98] sm:$0xff]
        %v1919 = vld [vmem:[#allocation2 + $0xa0] sm:$0xff]
        %v1920 = vld [vmem:[#allocation2 + $0xa8] sm:$0xff]
        %v1921 = vld [vmem:[#allocation2 + $0xb0] sm:$0xff]
        %v1922 = vld [vmem:[#allocation2 + $0xb8] sm:$0xff]
        %v1923 = vld [vmem:[#allocation8] sm:$0xff]
        %v1924 = vld [vmem:[#allocation8 + $0x8] sm:$0xff]
        %v1925 = vld [vmem:[#allocation8 + $0x10] sm:$0xff]
        %v1926 = vld [vmem:[#allocation8 + $0x18] sm:$0xff]
        %v1927 = vld [vmem:[#allocation8 + $0x20] sm:$0xff]
        %v1928 = vld [vmem:[#allocation8 + $0x28] sm:$0xff]
        %v1929 = vld [vmem:[#allocation8 + $0x30] sm:$0xff]
        %v1930 = vld [vmem:[#allocation8 + $0x38] sm:$0xff]
        %v1931 = vld [vmem:[#allocation8 + $0x40] sm:$0xff]
        %v1932 = vld [vmem:[#allocation8 + $0x48] sm:$0xff]
        %v1933 = vld [vmem:[#allocation8 + $0x50] sm:$0xff]
        %v1934 = vld [vmem:[#allocation8 + $0x58] sm:$0xff]
        %v1935 = vld [vmem:[#allocation8 + $0x60] sm:$0xff]
        %v1936 = vld [vmem:[#allocation8 + $0x68] sm:$0xff]
        %v1937 = vld [vmem:[#allocation8 + $0x70] sm:$0xff]
        %v1938 = vld [vmem:[#allocation8 + $0x78] sm:$0xff]
        %v1939 = vld [vmem:[#allocation8 + $0x80] sm:$0xff]
        %v1940 = vld [vmem:[#allocation8 + $0x88] sm:$0xff]
        %v1941 = vld [vmem:[#allocation8 + $0x90] sm:$0xff]
        %v1942 = vld [vmem:[#allocation8 + $0x98] sm:$0xff]
        %v1943 = vld [vmem:[#allocation8 + $0xa0] sm:$0xff]
        %v1944 = vld [vmem:[#allocation8 + $0xa8] sm:$0xff]
        %v1945 = vld [vmem:[#allocation8 + $0xb0] sm:$0xff]
        %v1946 = vld [vmem:[#allocation8 + $0xb8] sm:$0xff]
        %v1947 = vld [vmem:[#allocation8 + $0xc0] sm:$0xff]
        %v1948 = vld [vmem:[#allocation8 + $0xc8] sm:$0xff]
        %v1949 = vld [vmem:[#allocation8 + $0xd0] sm:$0xff]
        %v1950 = vld [vmem:[#allocation8 + $0xd8] sm:$0xff]
        %v1951 = vld [vmem:[#allocation8 + $0xe0] sm:$0xff]
        %v1952 = vld [vmem:[#allocation8 + $0xe8] sm:$0xff]
        %v1953 = vld [vmem:[#allocation8 + $0xf0] sm:$0xff]
        %v1954 = vld [vmem:[#allocation8 + $0xf8] sm:$0xff]
        %v1955 = vld [vmem:[#allocation8 + $0x100] sm:$0xff]
        %v1956 = vld [vmem:[#allocation8 + $0x108] sm:$0xff]
        %v1957 = vld [vmem:[#allocation8 + $0x110] sm:$0xff]
        %v1958 = vld [vmem:[#allocation8 + $0x118] sm:$0xff]
        %v1959 = vld [vmem:[#allocation8 + $0x120] sm:$0xff]
        %v1960 = vld [vmem:[#allocation8 + $0x128] sm:$0xff]
        %v1961 = vld [vmem:[#allocation8 + $0x130] sm:$0xff]
        %v1962 = vld [vmem:[#allocation8 + $0x138] sm:$0xff]
        %v1963 = vld [vmem:[#allocation8 + $0x140] sm:$0xff]
        %v1964 = vld [vmem:[#allocation8 + $0x148] sm:$0xff]
        %v1965 = vld [vmem:[#allocation8 + $0x150] sm:$0xff]
        %v1966 = vld [vmem:[#allocation8 + $0x158] sm:$0xff]
        %v1967 = vld [vmem:[#allocation8 + $0x160] sm:$0xff]
        %v1968 = vld [vmem:[#allocation8 + $0x168] sm:$0xff]
        %v1969 = vld [vmem:[#allocation8 + $0x170] sm:$0xff]
        %v1970 = vld [vmem:[#allocation8 + $0x178] sm:$0xff]
        %v1971 = vld [vmem:[#allocation8 + $0x180] sm:$0xff]
        %v1972 = vld [vmem:[#allocation8 + $0x188] sm:$0xff]
        %v1973 = vld [vmem:[#allocation8 + $0x190] sm:$0xff]
        %v1974 = vld [vmem:[#allocation8 + $0x198] sm:$0xff]
        %v1975 = vld [vmem:[#allocation8 + $0x1a0] sm:$0xff]
        %v1976 = vld [vmem:[#allocation8 + $0x1a8] sm:$0xff]
        %v1977 = vld [vmem:[#allocation8 + $0x1b0] sm:$0xff]
        %v1978 = vld [vmem:[#allocation8 + $0x1b8] sm:$0xff]
        %v1979 = vld [vmem:[#allocation8 + $0x1c0] sm:$0xff]
        %v1980 = vld [vmem:[#allocation8 + $0x1c8] sm:$0xff]
        %v1981 = vld [vmem:[#allocation8 + $0x1d0] sm:$0xff]
        %v1982 = vld [vmem:[#allocation8 + $0x1d8] sm:$0xff]
        %v1983 = vld [vmem:[#allocation8 + $0x1e0] sm:$0xff]
        %v1984 = vld [vmem:[#allocation8 + $0x1e8] sm:$0xff]
        %v1985 = vld [vmem:[#allocation8 + $0x1f0] sm:$0xff]
        %v1986 = vld [vmem:[#allocation8 + $0x1f8] sm:$0xff]
        %v1987 = vld [vmem:[#allocation8 + $0x200] sm:$0xff]
        %v1988 = vld [vmem:[#allocation8 + $0x208] sm:$0xff]
        %v1989 = vld [vmem:[#allocation8 + $0x210] sm:$0xff]
        %v1990 = vld [vmem:[#allocation8 + $0x218] sm:$0xff]
        %v1991 = vld [vmem:[#allocation8 + $0x220] sm:$0xff]
        %v1992 = vld [vmem:[#allocation8 + $0x228] sm:$0xff]
        %v1993 = vld [vmem:[#allocation8 + $0x230] sm:$0xff]
        %v1994 = vld [vmem:[#allocation8 + $0x238] sm:$0xff]
        %v1995 = vld [vmem:[#allocation8 + $0x240] sm:$0xff]
        %v1996 = vld [vmem:[#allocation8 + $0x248] sm:$0xff]
        %v1997 = vld [vmem:[#allocation8 + $0x250] sm:$0xff]
        %v1998 = vld [vmem:[#allocation8 + $0x258] sm:$0xff]
        %v1999 = vld [vmem:[#allocation8 + $0x260] sm:$0xff]
        %v2000 = vld [vmem:[#allocation8 + $0x268] sm:$0xff]
        %v2001 = vld [vmem:[#allocation8 + $0x270] sm:$0xff]
        %v2002 = vld [vmem:[#allocation8 + $0x278] sm:$0xff]
        %v2003 = vld [vmem:[#allocation8 + $0x280] sm:$0xff]
        %v2004 = vld [vmem:[#allocation8 + $0x288] sm:$0xff]
        %v2005 = vld [vmem:[#allocation8 + $0x290] sm:$0xff]
        %v2006 = vld [vmem:[#allocation8 + $0x298] sm:$0xff]
        %v2007 = vld [vmem:[#allocation8 + $0x2a0] sm:$0xff]
        %v2008 = vld [vmem:[#allocation8 + $0x2a8] sm:$0xff]
        %v2009 = vld [vmem:[#allocation8 + $0x2b0] sm:$0xff]
        %v2010 = vld [vmem:[#allocation8 + $0x2b8] sm:$0xff]
        %v2011 = vld [vmem:[#allocation8 + $0x2c0] sm:$0xff]
        %v2012 = vld [vmem:[#allocation8 + $0x2c8] sm:$0xff]
        %v2013 = vld [vmem:[#allocation8 + $0x2d0] sm:$0xff]
        %v2014 = vld [vmem:[#allocation8 + $0x2d8] sm:$0xff]
        %v2015 = vld [vmem:[#allocation8 + $0x2e0] sm:$0xff]
        %v2016 = vld [vmem:[#allocation8 + $0x2e8] sm:$0xff]
        %v2017 = vld [vmem:[#allocation8 + $0x2f0] sm:$0xff]
        %v2018 = vld [vmem:[#allocation8 + $0x2f8] sm:$0xff]
        %v2043 = vunpack.c.l.b16 %v1899
        %v2044 = vunpack.c.h.b16 %v1899
        %v2045 = vunpack.c.l.b16 %v1900
        %v2046 = vunpack.c.h.b16 %v1900
        %v2047 = vunpack.c.l.b16 %v1901
        %v2048 = vunpack.c.h.b16 %v1901
        %v2049 = vunpack.c.l.b16 %v1902
        %v2050 = vunpack.c.h.b16 %v1902
        %v2051 = vunpack.c.l.b16 %v1903
        %v2052 = vunpack.c.h.b16 %v1903
        %v2053 = vunpack.c.l.b16 %v1904
        %v2054 = vunpack.c.h.b16 %v1904
        %v2055 = vunpack.c.l.b16 %v1905
        %v2056 = vunpack.c.h.b16 %v1905
        %v2057 = vunpack.c.l.b16 %v1906
        %v2058 = vunpack.c.h.b16 %v1906
        %v2059 = vunpack.c.l.b16 %v1907
        %v2060 = vunpack.c.h.b16 %v1907
        %v2061 = vunpack.c.l.b16 %v1908
        %v2062 = vunpack.c.h.b16 %v1908
        %v2063 = vunpack.c.l.b16 %v1909
        %v2064 = vunpack.c.h.b16 %v1909
        %v2065 = vunpack.c.l.b16 %v1910
        %v2066 = vunpack.c.h.b16 %v1910
        %v2067 = vunpack.c.l.b16 %v1911
        %v2068 = vunpack.c.h.b16 %v1911
        %v2069 = vunpack.c.l.b16 %v1912
        %v2070 = vunpack.c.h.b16 %v1912
        %v2071 = vunpack.c.l.b16 %v1913
        %v2072 = vunpack.c.h.b16 %v1913
        %v2073 = vunpack.c.l.b16 %v1914
        %v2074 = vunpack.c.h.b16 %v1914
        %v2075 = vunpack.c.l.b16 %v1915
        %v2076 = vunpack.c.h.b16 %v1915
        %v2077 = vunpack.c.l.b16 %v1916
        %v2078 = vunpack.c.h.b16 %v1916
        %v2079 = vunpack.c.l.b16 %v1917
        %v2080 = vunpack.c.h.b16 %v1917
        %v2081 = vunpack.c.l.b16 %v1918
        %v2082 = vunpack.c.h.b16 %v1918
        %v2083 = vunpack.c.l.b16 %v1919
        %v2084 = vunpack.c.h.b16 %v1919
        %v2085 = vunpack.c.l.b16 %v1920
        %v2086 = vunpack.c.h.b16 %v1920
        %v2087 = vunpack.c.l.b16 %v1921
        %v2088 = vunpack.c.h.b16 %v1921
        %v2089 = vunpack.c.l.b16 %v1922
        %v2090 = vunpack.c.h.b16 %v1922
        %v2091 = vpack.c.b16 %v2049, %v2043
        %v2092 = vpack.c.b16 %v2050, %v2044
        %v2093 = vpack.c.b16 %v2051, %v2045
        %v2094 = vpack.c.b16 %v2052, %v2046
        %v2095 = vpack.c.b16 %v2053, %v2047
        %v2096 = vpack.c.b16 %v2054, %v2048
        %v2097 = vpack.c.b16 %v2061, %v2055
        %v2098 = vpack.c.b16 %v2062, %v2056
        %v2099 = vpack.c.b16 %v2063, %v2057
        %v2100 = vpack.c.b16 %v2064, %v2058
        %v2101 = vpack.c.b16 %v2065, %v2059
        %v2102 = vpack.c.b16 %v2066, %v2060
        %v2103 = vpack.c.b16 %v2073, %v2067
        %v2104 = vpack.c.b16 %v2074, %v2068
        %v2105 = vpack.c.b16 %v2075, %v2069
        %v2106 = vpack.c.b16 %v2076, %v2070
        %v2107 = vpack.c.b16 %v2077, %v2071
        %v2108 = vpack.c.b16 %v2078, %v2072
        %v2109 = vpack.c.b16 %v2085, %v2079
        %v2110 = vpack.c.b16 %v2086, %v2080
        %v2111 = vpack.c.b16 %v2087, %v2081
        %v2112 = vpack.c.b16 %v2088, %v2082
        %v2113 = vpack.c.b16 %v2089, %v2083
        %v2114 = vpack.c.b16 %v2090, %v2084
        %v2235 = vunpack.c.l.b16 %v1923
        %v2236 = vunpack.c.h.b16 %v1923
        %v2237 = vunpack.c.l.b16 %v1924
        %v2238 = vunpack.c.h.b16 %v1924
        %v2239 = vunpack.c.l.b16 %v1925
        %v2240 = vunpack.c.h.b16 %v1925
        %v2241 = vunpack.c.l.b16 %v1926
        %v2242 = vunpack.c.h.b16 %v1926
        %v2243 = vunpack.c.l.b16 %v1927
        %v2244 = vunpack.c.h.b16 %v1927
        %v2245 = vunpack.c.l.b16 %v1928
        %v2246 = vunpack.c.h.b16 %v1928
        %v2247 = vunpack.c.l.b16 %v1929
        %v2248 = vunpack.c.h.b16 %v1929
        %v2249 = vunpack.c.l.b16 %v1930
        %v2250 = vunpack.c.h.b16 %v1930
        %v2251 = vunpack.c.l.b16 %v1931
        %v2252 = vunpack.c.h.b16 %v1931
        %v2253 = vunpack.c.l.b16 %v1932
        %v2254 = vunpack.c.h.b16 %v1932
        %v2255 = vunpack.c.l.b16 %v1933
        %v2256 = vunpack.c.h.b16 %v1933
        %v2257 = vunpack.c.l.b16 %v1934
        %v2258 = vunpack.c.h.b16 %v1934
        %v2259 = vunpack.c.l.b16 %v1935
        %v2260 = vunpack.c.h.b16 %v1935
        %v2261 = vunpack.c.l.b16 %v1936
        %v2262 = vunpack.c.h.b16 %v1936
        %v2263 = vunpack.c.l.b16 %v1937
        %v2264 = vunpack.c.h.b16 %v1937
        %v2265 = vunpack.c.l.b16 %v1938
        %v2266 = vunpack.c.h.b16 %v1938
        %v2267 = vunpack.c.l.b16 %v1939
        %v2268 = vunpack.c.h.b16 %v1939
        %v2269 = vunpack.c.l.b16 %v1940
        %v2270 = vunpack.c.h.b16 %v1940
        %v2271 = vunpack.c.l.b16 %v1941
        %v2272 = vunpack.c.h.b16 %v1941
        %v2273 = vunpack.c.l.b16 %v1942
        %v2274 = vunpack.c.h.b16 %v1942
        %v2275 = vunpack.c.l.b16 %v1943
        %v2276 = vunpack.c.h.b16 %v1943
        %v2277 = vunpack.c.l.b16 %v1944
        %v2278 = vunpack.c.h.b16 %v1944
        %v2279 = vunpack.c.l.b16 %v1945
        %v2280 = vunpack.c.h.b16 %v1945
        %v2281 = vunpack.c.l.b16 %v1946
        %v2282 = vunpack.c.h.b16 %v1946
        %v2283 = vunpack.c.l.b16 %v1947
        %v2284 = vunpack.c.h.b16 %v1947
        %v2285 = vunpack.c.l.b16 %v1948
        %v2286 = vunpack.c.h.b16 %v1948
        %v2287 = vunpack.c.l.b16 %v1949
        %v2288 = vunpack.c.h.b16 %v1949
        %v2289 = vunpack.c.l.b16 %v1950
        %v2290 = vunpack.c.h.b16 %v1950
        %v2291 = vunpack.c.l.b16 %v1951
        %v2292 = vunpack.c.h.b16 %v1951
        %v2293 = vunpack.c.l.b16 %v1952
        %v2294 = vunpack.c.h.b16 %v1952
        %v2295 = vunpack.c.l.b16 %v1953
        %v2296 = vunpack.c.h.b16 %v1953
        %v2297 = vunpack.c.l.b16 %v1954
        %v2298 = vunpack.c.h.b16 %v1954
        %v2299 = vunpack.c.l.b16 %v1955
        %v2300 = vunpack.c.h.b16 %v1955
        %v2301 = vunpack.c.l.b16 %v1956
        %v2302 = vunpack.c.h.b16 %v1956
        %v2303 = vunpack.c.l.b16 %v1957
        %v2304 = vunpack.c.h.b16 %v1957
        %v2305 = vunpack.c.l.b16 %v1958
        %v2306 = vunpack.c.h.b16 %v1958
        %v2307 = vunpack.c.l.b16 %v1959
        %v2308 = vunpack.c.h.b16 %v1959
        %v2309 = vunpack.c.l.b16 %v1960
        %v2310 = vunpack.c.h.b16 %v1960
        %v2311 = vunpack.c.l.b16 %v1961
        %v2312 = vunpack.c.h.b16 %v1961
        %v2313 = vunpack.c.l.b16 %v1962
        %v2314 = vunpack.c.h.b16 %v1962
        %v2315 = vunpack.c.l.b16 %v1963
        %v2316 = vunpack.c.h.b16 %v1963
        %v2317 = vunpack.c.l.b16 %v1964
        %v2318 = vunpack.c.h.b16 %v1964
        %v2319 = vunpack.c.l.b16 %v1965
        %v2320 = vunpack.c.h.b16 %v1965
        %v2321 = vunpack.c.l.b16 %v1966
        %v2322 = vunpack.c.h.b16 %v1966
        %v2323 = vunpack.c.l.b16 %v1967
        %v2324 = vunpack.c.h.b16 %v1967
        %v2325 = vunpack.c.l.b16 %v1968
        %v2326 = vunpack.c.h.b16 %v1968
        %v2327 = vunpack.c.l.b16 %v1969
        %v2328 = vunpack.c.h.b16 %v1969
        %v2329 = vunpack.c.l.b16 %v1970
        %v2330 = vunpack.c.h.b16 %v1970
        %v2331 = vunpack.c.l.b16 %v1971
        %v2332 = vunpack.c.h.b16 %v1971
        %v2333 = vunpack.c.l.b16 %v1972
        %v2334 = vunpack.c.h.b16 %v1972
        %v2335 = vunpack.c.l.b16 %v1973
        %v2336 = vunpack.c.h.b16 %v1973
        %v2337 = vunpack.c.l.b16 %v1974
        %v2338 = vunpack.c.h.b16 %v1974
        %v2339 = vunpack.c.l.b16 %v1975
        %v2340 = vunpack.c.h.b16 %v1975
        %v2341 = vunpack.c.l.b16 %v1976
        %v2342 = vunpack.c.h.b16 %v1976
        %v2343 = vunpack.c.l.b16 %v1977
        %v2344 = vunpack.c.h.b16 %v1977
        %v2345 = vunpack.c.l.b16 %v1978
        %v2346 = vunpack.c.h.b16 %v1978
        %v2347 = vunpack.c.l.b16 %v1979
        %v2348 = vunpack.c.h.b16 %v1979
        %v2349 = vunpack.c.l.b16 %v1980
        %v2350 = vunpack.c.h.b16 %v1980
        %v2351 = vunpack.c.l.b16 %v1981
        %v2352 = vunpack.c.h.b16 %v1981
        %v2353 = vunpack.c.l.b16 %v1982
        %v2354 = vunpack.c.h.b16 %v1982
        %v2355 = vunpack.c.l.b16 %v1983
        %v2356 = vunpack.c.h.b16 %v1983
        %v2357 = vunpack.c.l.b16 %v1984
        %v2358 = vunpack.c.h.b16 %v1984
        %v2359 = vunpack.c.l.b16 %v1985
        %v2360 = vunpack.c.h.b16 %v1985
        %v2361 = vunpack.c.l.b16 %v1986
        %v2362 = vunpack.c.h.b16 %v1986
        %v2363 = vunpack.c.l.b16 %v1987
        %v2364 = vunpack.c.h.b16 %v1987
        %v2365 = vunpack.c.l.b16 %v1988
        %v2366 = vunpack.c.h.b16 %v1988
        %v2367 = vunpack.c.l.b16 %v1989
        %v2368 = vunpack.c.h.b16 %v1989
        %v2369 = vunpack.c.l.b16 %v1990
        %v2370 = vunpack.c.h.b16 %v1990
        %v2371 = vunpack.c.l.b16 %v1991
        %v2372 = vunpack.c.h.b16 %v1991
        %v2373 = vunpack.c.l.b16 %v1992
        %v2374 = vunpack.c.h.b16 %v1992
        %v2375 = vunpack.c.l.b16 %v1993
        %v2376 = vunpack.c.h.b16 %v1993
        %v2377 = vunpack.c.l.b16 %v1994
        %v2378 = vunpack.c.h.b16 %v1994
        %v2379 = vunpack.c.l.b16 %v1995
        %v2380 = vunpack.c.h.b16 %v1995
        %v2381 = vunpack.c.l.b16 %v1996
        %v2382 = vunpack.c.h.b16 %v1996
        %v2383 = vunpack.c.l.b16 %v1997
        %v2384 = vunpack.c.h.b16 %v1997
        %v2385 = vunpack.c.l.b16 %v1998
        %v2386 = vunpack.c.h.b16 %v1998
        %v2387 = vunpack.c.l.b16 %v1999
        %v2388 = vunpack.c.h.b16 %v1999
        %v2389 = vunpack.c.l.b16 %v2000
        %v2390 = vunpack.c.h.b16 %v2000
        %v2391 = vunpack.c.l.b16 %v2001
        %v2392 = vunpack.c.h.b16 %v2001
        %v2393 = vunpack.c.l.b16 %v2002
        %v2394 = vunpack.c.h.b16 %v2002
        %v2395 = vunpack.c.l.b16 %v2003
        %v2396 = vunpack.c.h.b16 %v2003
        %v2397 = vunpack.c.l.b16 %v2004
        %v2398 = vunpack.c.h.b16 %v2004
        %v2399 = vunpack.c.l.b16 %v2005
        %v2400 = vunpack.c.h.b16 %v2005
        %v2401 = vunpack.c.l.b16 %v2006
        %v2402 = vunpack.c.h.b16 %v2006
        %v2403 = vunpack.c.l.b16 %v2007
        %v2404 = vunpack.c.h.b16 %v2007
        %v2405 = vunpack.c.l.b16 %v2008
        %v2406 = vunpack.c.h.b16 %v2008
        %v2407 = vunpack.c.l.b16 %v2009
        %v2408 = vunpack.c.h.b16 %v2009
        %v2409 = vunpack.c.l.b16 %v2010
        %v2410 = vunpack.c.h.b16 %v2010
        %v2411 = vunpack.c.l.b16 %v2011
        %v2412 = vunpack.c.h.b16 %v2011
        %v2413 = vunpack.c.l.b16 %v2012
        %v2414 = vunpack.c.h.b16 %v2012
        %v2415 = vunpack.c.l.b16 %v2013
        %v2416 = vunpack.c.h.b16 %v2013
        %v2417 = vunpack.c.l.b16 %v2014
        %v2418 = vunpack.c.h.b16 %v2014
        %v2419 = vunpack.c.l.b16 %v2015
        %v2420 = vunpack.c.h.b16 %v2015
        %v2421 = vunpack.c.l.b16 %v2016
        %v2422 = vunpack.c.h.b16 %v2016
        %v2423 = vunpack.c.l.b16 %v2017
        %v2424 = vunpack.c.h.b16 %v2017
        %v2425 = vunpack.c.l.b16 %v2018
        %v2426 = vunpack.c.h.b16 %v2018
        %v2427 = vpack.c.b16 %v2237, %v2235
        %v2428 = vpack.c.b16 %v2238, %v2236
        %v2429 = vpack.c.b16 %v2241, %v2239
        %v2430 = vpack.c.b16 %v2242, %v2240
        %v2431 = vpack.c.b16 %v2245, %v2243
        %v2432 = vpack.c.b16 %v2246, %v2244
        %v2433 = vpack.c.b16 %v2249, %v2247
        %v2434 = vpack.c.b16 %v2250, %v2248
        %v2435 = vpack.c.b16 %v2253, %v2251
        %v2436 = vpack.c.b16 %v2254, %v2252
        %v2437 = vpack.c.b16 %v2257, %v2255
        %v2438 = vpack.c.b16 %v2258, %v2256
        %v2439 = vpack.c.b16 %v2261, %v2259
        %v2440 = vpack.c.b16 %v2262, %v2260
        %v2441 = vpack.c.b16 %v2265, %v2263
        %v2442 = vpack.c.b16 %v2266, %v2264
        %v2443 = vpack.c.b16 %v2269, %v2267
        %v2444 = vpack.c.b16 %v2270, %v2268
        %v2445 = vpack.c.b16 %v2273, %v2271
        %v2446 = vpack.c.b16 %v2274, %v2272
        %v2447 = vpack.c.b16 %v2277, %v2275
        %v2448 = vpack.c.b16 %v2278, %v2276
        %v2449 = vpack.c.b16 %v2281, %v2279
        %v2450 = vpack.c.b16 %v2282, %v2280
        %v2451 = vpack.c.b16 %v2285, %v2283
        %v2452 = vpack.c.b16 %v2286, %v2284
        %v2453 = vpack.c.b16 %v2289, %v2287
        %v2454 = vpack.c.b16 %v2290, %v2288
        %v2455 = vpack.c.b16 %v2293, %v2291
        %v2456 = vpack.c.b16 %v2294, %v2292
        %v2457 = vpack.c.b16 %v2297, %v2295
        %v2458 = vpack.c.b16 %v2298, %v2296
        %v2459 = vpack.c.b16 %v2301, %v2299
        %v2460 = vpack.c.b16 %v2302, %v2300
        %v2461 = vpack.c.b16 %v2305, %v2303
        %v2462 = vpack.c.b16 %v2306, %v2304
        %v2463 = vpack.c.b16 %v2309, %v2307
        %v2464 = vpack.c.b16 %v2310, %v2308
        %v2465 = vpack.c.b16 %v2313, %v2311
        %v2466 = vpack.c.b16 %v2314, %v2312
        %v2467 = vpack.c.b16 %v2317, %v2315
        %v2468 = vpack.c.b16 %v2318, %v2316
        %v2469 = vpack.c.b16 %v2321, %v2319
        %v2470 = vpack.c.b16 %v2322, %v2320
        %v2471 = vpack.c.b16 %v2325, %v2323
        %v2472 = vpack.c.b16 %v2326, %v2324
        %v2473 = vpack.c.b16 %v2329, %v2327
        %v2474 = vpack.c.b16 %v2330, %v2328
        %v2475 = vpack.c.b16 %v2333, %v2331
        %v2476 = vpack.c.b16 %v2334, %v2332
        %v2477 = vpack.c.b16 %v2337, %v2335
        %v2478 = vpack.c.b16 %v2338, %v2336
        %v2479 = vpack.c.b16 %v2341, %v2339
        %v2480 = vpack.c.b16 %v2342, %v2340
        %v2481 = vpack.c.b16 %v2345, %v2343
        %v2482 = vpack.c.b16 %v2346, %v2344
        %v2483 = vpack.c.b16 %v2349, %v2347
        %v2484 = vpack.c.b16 %v2350, %v2348
        %v2485 = vpack.c.b16 %v2353, %v2351
        %v2486 = vpack.c.b16 %v2354, %v2352
        %v2487 = vpack.c.b16 %v2357, %v2355
        %v2488 = vpack.c.b16 %v2358, %v2356
        %v2489 = vpack.c.b16 %v2361, %v2359
        %v2490 = vpack.c.b16 %v2362, %v2360
        %v2491 = vpack.c.b16 %v2365, %v2363
        %v2492 = vpack.c.b16 %v2366, %v2364
        %v2493 = vpack.c.b16 %v2369, %v2367
        %v2494 = vpack.c.b16 %v2370, %v2368
        %v2495 = vpack.c.b16 %v2373, %v2371
        %v2496 = vpack.c.b16 %v2374, %v2372
        %v2497 = vpack.c.b16 %v2377, %v2375
        %v2498 = vpack.c.b16 %v2378, %v2376
        %v2499 = vpack.c.b16 %v2381, %v2379
        %v2500 = vpack.c.b16 %v2382, %v2380
        %v2501 = vpack.c.b16 %v2385, %v2383
        %v2502 = vpack.c.b16 %v2386, %v2384
        %v2503 = vpack.c.b16 %v2389, %v2387
        %v2504 = vpack.c.b16 %v2390, %v2388
        %v2505 = vpack.c.b16 %v2393, %v2391
        %v2506 = vpack.c.b16 %v2394, %v2392
        %v2507 = vpack.c.b16 %v2397, %v2395
        %v2508 = vpack.c.b16 %v2398, %v2396
        %v2509 = vpack.c.b16 %v2401, %v2399
        %v2510 = vpack.c.b16 %v2402, %v2400
        %v2511 = vpack.c.b16 %v2405, %v2403
        %v2512 = vpack.c.b16 %v2406, %v2404
        %v2513 = vpack.c.b16 %v2409, %v2407
        %v2514 = vpack.c.b16 %v2410, %v2408
        %v2515 = vpack.c.b16 %v2413, %v2411
        %v2516 = vpack.c.b16 %v2414, %v2412
        %v2517 = vpack.c.b16 %v2417, %v2415
        %v2518 = vpack.c.b16 %v2418, %v2416
        %v2519 = vpack.c.b16 %v2421, %v2419
        %v2520 = vpack.c.b16 %v2422, %v2420
        %v2521 = vpack.c.b16 %v2425, %v2423
        %v2522 = vpack.c.b16 %v2426, %v2424
        %2619 = vmatpush.bf16.msra.mxu0 %v2441
        %2620 = vmatpush.bf16.msra.mxu0 %v2439
        %2621 = vmatpush.bf16.msra.mxu0 %v2437
        %2622 = vmatpush.bf16.msra.mxu0 %v2435
        %2623 = vmatpush.bf16.msra.mxu0 %v2433
        %2624 = vmatpush.bf16.msra.mxu0 %v2431
        %2625 = vmatpush.bf16.msra.mxu0 %v2429
        %2626 = vmatpush.bf16.msra.mxu0 %v2427
        %2627 = vmatmul.bf16.gmra.mxu0 %v2091
        %v2628 = vpop.f32.mrf.mxu0
        %v2629 = vadd.f32 0.0, %v2628
        %v2630 = vpop.f32.mrf.mxu0
        %v2631 = vadd.f32 0.0, %v2630
        %2632 = vmatmul.bf16.gmra.mxu0 %v2097
        %v2633 = vpop.f32.mrf.mxu0
        %v2634 = vadd.f32 0.0, %v2633
        %v2635 = vpop.f32.mrf.mxu0
        %v2636 = vadd.f32 0.0, %v2635
        %2637 = vmatmul.bf16.gmra.mxu0 %v2103
        %v2638 = vpop.f32.mrf.mxu0
        %v2639 = vadd.f32 0.0, %v2638
        %v2640 = vpop.f32.mrf.mxu0
        %v2641 = vadd.f32 0.0, %v2640
        %2642 = vmatmul.bf16.gmra.mxu0 %v2109
        %v2643 = vpop.f32.mrf.mxu0
        %v2644 = vadd.f32 0.0, %v2643
        %v2645 = vpop.f32.mrf.mxu0
        %v2646 = vadd.f32 0.0, %v2645
        %2647 = vdwg.mxu0
        %2648 = vmatpush.bf16.msra.mxu0 %v2457
        %2649 = vmatpush.bf16.msra.mxu0 %v2455
        %2650 = vmatpush.bf16.msra.mxu0 %v2453
        %2651 = vmatpush.bf16.msra.mxu0 %v2451
        %2652 = vmatpush.bf16.msra.mxu0 %v2449
        %2653 = vmatpush.bf16.msra.mxu0 %v2447
        %2654 = vmatpush.bf16.msra.mxu0 %v2445
        %2655 = vmatpush.bf16.msra.mxu0 %v2443
        %2656 = vmatmul.bf16.gmra.mxu0 %v2092
        %v2657 = vpop.f32.mrf.mxu0
        %v2658 = vadd.f32 %v2629, %v2657
        %v2659 = vpop.f32.mrf.mxu0
        %v2660 = vadd.f32 %v2631, %v2659
        %2661 = vmatmul.bf16.gmra.mxu0 %v2098
        %v2662 = vpop.f32.mrf.mxu0
        %v2663 = vadd.f32 %v2634, %v2662
        %v2664 = vpop.f32.mrf.mxu0
        %v2665 = vadd.f32 %v2636, %v2664
        %2666 = vmatmul.bf16.gmra.mxu0 %v2104
        %v2667 = vpop.f32.mrf.mxu0
        %v2668 = vadd.f32 %v2639, %v2667
        %v2669 = vpop.f32.mrf.mxu0
        %v2670 = vadd.f32 %v2641, %v2669
        %2671 = vmatmul.bf16.gmra.mxu0 %v2110
        %v2672 = vpop.f32.mrf.mxu0
        %v2673 = vadd.f32 %v2644, %v2672
        %v2674 = vpop.f32.mrf.mxu0
        %v2675 = vadd.f32 %v2646, %v2674
        %2676 = vdwg.mxu0
        %2677 = vmatpush.bf16.msra.mxu0 %v2473
        %2678 = vmatpush.bf16.msra.mxu0 %v2471
        %2679 = vmatpush.bf16.msra.mxu0 %v2469
        %2680 = vmatpush.bf16.msra.mxu0 %v2467
        %2681 = vmatpush.bf16.msra.mxu0 %v2465
        %2682 = vmatpush.bf16.msra.mxu0 %v2463
        %2683 = vmatpush.bf16.msra.mxu0 %v2461
        %2684 = vmatpush.bf16.msra.mxu0 %v2459
        %2685 = vmatmul.bf16.gmra.mxu0 %v2093
        %v2686 = vpop.f32.mrf.mxu0
        %v2687 = vadd.f32 %v2658, %v2686
        %v2688 = vpop.f32.mrf.mxu0
        %v2689 = vadd.f32 %v2660, %v2688
        %2690 = vmatmul.bf16.gmra.mxu0 %v2099
        %v2691 = vpop.f32.mrf.mxu0
        %v2692 = vadd.f32 %v2663, %v2691
        %v2693 = vpop.f32.mrf.mxu0
        %v2694 = vadd.f32 %v2665, %v2693
        %2695 = vmatmul.bf16.gmra.mxu0 %v2105
        %v2696 = vpop.f32.mrf.mxu0
        %v2697 = vadd.f32 %v2668, %v2696
        %v2698 = vpop.f32.mrf.mxu0
        %v2699 = vadd.f32 %v2670, %v2698
        %2700 = vmatmul.bf16.gmra.mxu0 %v2111
        %v2701 = vpop.f32.mrf.mxu0
        %v2702 = vadd.f32 %v2673, %v2701
        %v2703 = vpop.f32.mrf.mxu0
        %v2704 = vadd.f32 %v2675, %v2703
        %2705 = vdwg.mxu0
        %2706 = vmatpush.bf16.msra.mxu0 %v2489
        %2707 = vmatpush.bf16.msra.mxu0 %v2487
        %2708 = vmatpush.bf16.msra.mxu0 %v2485
        %2709 = vmatpush.bf16.msra.mxu0 %v2483
        %2710 = vmatpush.bf16.msra.mxu0 %v2481
        %2711 = vmatpush.bf16.msra.mxu0 %v2479
        %2712 = vmatpush.bf16.msra.mxu0 %v2477
        %2713 = vmatpush.bf16.msra.mxu0 %v2475
        %2714 = vmatmul.bf16.gmra.mxu0 %v2094
        %v2715 = vpop.f32.mrf.mxu0
        %v2716 = vadd.f32 %v2687, %v2715
        %v2717 = vpop.f32.mrf.mxu0
        %v2718 = vadd.f32 %v2689, %v2717
        %2719 = vmatmul.bf16.gmra.mxu0 %v2100
        %v2720 = vpop.f32.mrf.mxu0
        %v2721 = vadd.f32 %v2692, %v2720
        %v2722 = vpop.f32.mrf.mxu0
        %v2723 = vadd.f32 %v2694, %v2722
        %2724 = vmatmul.bf16.gmra.mxu0 %v2106
        %v2725 = vpop.f32.mrf.mxu0
        %v2726 = vadd.f32 %v2697, %v2725
        %v2727 = vpop.f32.mrf.mxu0
        %v2728 = vadd.f32 %v2699, %v2727
        %2729 = vmatmul.bf16.gmra.mxu0 %v2112
        %v2730 = vpop.f32.mrf.mxu0
        %v2731 = vadd.f32 %v2702, %v2730
        %v2732 = vpop.f32.mrf.mxu0
        %v2733 = vadd.f32 %v2704, %v2732
        %2734 = vdwg.mxu0
        %2735 = vmatpush.bf16.msra.mxu0 %v2505
        %2736 = vmatpush.bf16.msra.mxu0 %v2503
        %2737 = vmatpush.bf16.msra.mxu0 %v2501
        %2738 = vmatpush.bf16.msra.mxu0 %v2499
        %2739 = vmatpush.bf16.msra.mxu0 %v2497
        %2740 = vmatpush.bf16.msra.mxu0 %v2495
        %2741 = vmatpush.bf16.msra.mxu0 %v2493
        %2742 = vmatpush.bf16.msra.mxu0 %v2491
        %2743 = vmatmul.bf16.gmra.mxu0 %v2095
        %v2744 = vpop.f32.mrf.mxu0
        %v2745 = vadd.f32 %v2716, %v2744
        %v2746 = vpop.f32.mrf.mxu0
        %v2747 = vadd.f32 %v2718, %v2746
        %2748 = vmatmul.bf16.gmra.mxu0 %v2101
        %v2749 = vpop.f32.mrf.mxu0
        %v2750 = vadd.f32 %v2721, %v2749
        %v2751 = vpop.f32.mrf.mxu0
        %v2752 = vadd.f32 %v2723, %v2751
        %2753 = vmatmul.bf16.gmra.mxu0 %v2107
        %v2754 = vpop.f32.mrf.mxu0
        %v2755 = vadd.f32 %v2726, %v2754
        %v2756 = vpop.f32.mrf.mxu0
        %v2757 = vadd.f32 %v2728, %v2756
        %2758 = vmatmul.bf16.gmra.mxu0 %v2113
        %v2759 = vpop.f32.mrf.mxu0
        %v2760 = vadd.f32 %v2731, %v2759
        %v2761 = vpop.f32.mrf.mxu0
        %v2762 = vadd.f32 %v2733, %v2761
        %2763 = vdwg.mxu0
        %2764 = vmatpush.bf16.msra.mxu0 %v2521
        %2765 = vmatpush.bf16.msra.mxu0 %v2519
        %2766 = vmatpush.bf16.msra.mxu0 %v2517
        %2767 = vmatpush.bf16.msra.mxu0 %v2515
        %2768 = vmatpush.bf16.msra.mxu0 %v2513
        %2769 = vmatpush.bf16.msra.mxu0 %v2511
        %2770 = vmatpush.bf16.msra.mxu0 %v2509
        %2771 = vmatpush.bf16.msra.mxu0 %v2507
        %2772 = vmatmul.bf16.gmra.mxu0 %v2096
        %v2773 = vpop.f32.mrf.mxu0
        %v2774 = vadd.f32 %v2745, %v2773
        %v2775 = vpop.f32.mrf.mxu0
        %v2776 = vadd.f32 %v2747, %v2775
        %2777 = vmatmul.bf16.gmra.mxu0 %v2102
        %v2778 = vpop.f32.mrf.mxu0
        %v2779 = vadd.f32 %v2750, %v2778
        %v2780 = vpop.f32.mrf.mxu0
        %v2781 = vadd.f32 %v2752, %v2780
        %2782 = vmatmul.bf16.gmra.mxu0 %v2108
        %v2783 = vpop.f32.mrf.mxu0
        %v2784 = vadd.f32 %v2755, %v2783
        %v2785 = vpop.f32.mrf.mxu0
        %v2786 = vadd.f32 %v2757, %v2785
        %2787 = vmatmul.bf16.gmra.mxu0 %v2114
        %v2788 = vpop.f32.mrf.mxu0
        %v2789 = vadd.f32 %v2760, %v2788
        %v2790 = vpop.f32.mrf.mxu0
        %v2791 = vadd.f32 %v2762, %v2790
        %2792 = vdwg.mxu0
        %2793 = vmatpush.bf16.msra.mxu0 %v2442
        %2794 = vmatpush.bf16.msra.mxu0 %v2440
        %2795 = vmatpush.bf16.msra.mxu0 %v2438
        %2796 = vmatpush.bf16.msra.mxu0 %v2436
        %2797 = vmatpush.bf16.msra.mxu0 %v2434
        %2798 = vmatpush.bf16.msra.mxu0 %v2432
        %2799 = vmatpush.bf16.msra.mxu0 %v2430
        %2800 = vmatpush.bf16.msra.mxu0 %v2428
        %2801 = vmatmul.bf16.gmra.mxu0 %v2091
        %v2802 = vpop.f32.mrf.mxu0
        %v2803 = vadd.f32 0.0, %v2802
        %v2804 = vpop.f32.mrf.mxu0
        %v2805 = vadd.f32 0.0, %v2804
        %2806 = vmatmul.bf16.gmra.mxu0 %v2097
        %v2807 = vpop.f32.mrf.mxu0
        %v2808 = vadd.f32 0.0, %v2807
        %v2809 = vpop.f32.mrf.mxu0
        %v2810 = vadd.f32 0.0, %v2809
        %2811 = vmatmul.bf16.gmra.mxu0 %v2103
        %v2812 = vpop.f32.mrf.mxu0
        %v2813 = vadd.f32 0.0, %v2812
        %v2814 = vpop.f32.mrf.mxu0
        %v2815 = vadd.f32 0.0, %v2814
        %2816 = vmatmul.bf16.gmra.mxu0 %v2109
        %v2817 = vpop.f32.mrf.mxu0
        %v2818 = vadd.f32 0.0, %v2817
        %v2819 = vpop.f32.mrf.mxu0
        %v2820 = vadd.f32 0.0, %v2819
        %2821 = vdwg.mxu0
        %2822 = vmatpush.bf16.msra.mxu0 %v2458
        %2823 = vmatpush.bf16.msra.mxu0 %v2456
        %2824 = vmatpush.bf16.msra.mxu0 %v2454
        %2825 = vmatpush.bf16.msra.mxu0 %v2452
        %2826 = vmatpush.bf16.msra.mxu0 %v2450
        %2827 = vmatpush.bf16.msra.mxu0 %v2448
        %2828 = vmatpush.bf16.msra.mxu0 %v2446
        %2829 = vmatpush.bf16.msra.mxu0 %v2444
        %2830 = vmatmul.bf16.gmra.mxu0 %v2092
        %v2831 = vpop.f32.mrf.mxu0
        %v2832 = vadd.f32 %v2803, %v2831
        %v2833 = vpop.f32.mrf.mxu0
        %v2834 = vadd.f32 %v2805, %v2833
        %2835 = vmatmul.bf16.gmra.mxu0 %v2098
        %v2836 = vpop.f32.mrf.mxu0
        %v2837 = vadd.f32 %v2808, %v2836
        %v2838 = vpop.f32.mrf.mxu0
        %v2839 = vadd.f32 %v2810, %v2838
        %2840 = vmatmul.bf16.gmra.mxu0 %v2104
        %v2841 = vpop.f32.mrf.mxu0
        %v2842 = vadd.f32 %v2813, %v2841
        %v2843 = vpop.f32.mrf.mxu0
        %v2844 = vadd.f32 %v2815, %v2843
        %2845 = vmatmul.bf16.gmra.mxu0 %v2110
        %v2846 = vpop.f32.mrf.mxu0
        %v2847 = vadd.f32 %v2818, %v2846
        %v2848 = vpop.f32.mrf.mxu0
        %v2849 = vadd.f32 %v2820, %v2848
        %2850 = vdwg.mxu0
        %2851 = vmatpush.bf16.msra.mxu0 %v2474
        %2852 = vmatpush.bf16.msra.mxu0 %v2472
        %2853 = vmatpush.bf16.msra.mxu0 %v2470
        %2854 = vmatpush.bf16.msra.mxu0 %v2468
        %2855 = vmatpush.bf16.msra.mxu0 %v2466
        %2856 = vmatpush.bf16.msra.mxu0 %v2464
        %2857 = vmatpush.bf16.msra.mxu0 %v2462
        %2858 = vmatpush.bf16.msra.mxu0 %v2460
        %2859 = vmatmul.bf16.gmra.mxu0 %v2093
        %v2860 = vpop.f32.mrf.mxu0
        %v2861 = vadd.f32 %v2832, %v2860
        %v2862 = vpop.f32.mrf.mxu0
        %v2863 = vadd.f32 %v2834, %v2862
        %2864 = vmatmul.bf16.gmra.mxu0 %v2099
        %v2865 = vpop.f32.mrf.mxu0
        %v2866 = vadd.f32 %v2837, %v2865
        %v2867 = vpop.f32.mrf.mxu0
        %v2868 = vadd.f32 %v2839, %v2867
        %2869 = vmatmul.bf16.gmra.mxu0 %v2105
        %v2870 = vpop.f32.mrf.mxu0
        %v2871 = vadd.f32 %v2842, %v2870
        %v2872 = vpop.f32.mrf.mxu0
        %v2873 = vadd.f32 %v2844, %v2872
        %2874 = vmatmul.bf16.gmra.mxu0 %v2111
        %v2875 = vpop.f32.mrf.mxu0
        %v2876 = vadd.f32 %v2847, %v2875
        %v2877 = vpop.f32.mrf.mxu0
        %v2878 = vadd.f32 %v2849, %v2877
        %2879 = vdwg.mxu0
        %2880 = vmatpush.bf16.msra.mxu0 %v2490
        %2881 = vmatpush.bf16.msra.mxu0 %v2488
        %2882 = vmatpush.bf16.msra.mxu0 %v2486
        %2883 = vmatpush.bf16.msra.mxu0 %v2484
        %2884 = vmatpush.bf16.msra.mxu0 %v2482
        %2885 = vmatpush.bf16.msra.mxu0 %v2480
        %2886 = vmatpush.bf16.msra.mxu0 %v2478
        %2887 = vmatpush.bf16.msra.mxu0 %v2476
        %2888 = vmatmul.bf16.gmra.mxu0 %v2094
        %v2889 = vpop.f32.mrf.mxu0
        %v2890 = vadd.f32 %v2861, %v2889
        %v2891 = vpop.f32.mrf.mxu0
        %v2892 = vadd.f32 %v2863, %v2891
        %2893 = vmatmul.bf16.gmra.mxu0 %v2100
        %v2894 = vpop.f32.mrf.mxu0
        %v2895 = vadd.f32 %v2866, %v2894
        %v2896 = vpop.f32.mrf.mxu0
        %v2897 = vadd.f32 %v2868, %v2896
        %2898 = vmatmul.bf16.gmra.mxu0 %v2106
        %v2899 = vpop.f32.mrf.mxu0
        %v2900 = vadd.f32 %v2871, %v2899
        %v2901 = vpop.f32.mrf.mxu0
        %v2902 = vadd.f32 %v2873, %v2901
        %2903 = vmatmul.bf16.gmra.mxu0 %v2112
        %v2904 = vpop.f32.mrf.mxu0
        %v2905 = vadd.f32 %v2876, %v2904
        %v2906 = vpop.f32.mrf.mxu0
        %v2907 = vadd.f32 %v2878, %v2906
        %2908 = vdwg.mxu0
        %2909 = vmatpush.bf16.msra.mxu0 %v2506
        %2910 = vmatpush.bf16.msra.mxu0 %v2504
        %2911 = vmatpush.bf16.msra.mxu0 %v2502
        %2912 = vmatpush.bf16.msra.mxu0 %v2500
        %2913 = vmatpush.bf16.msra.mxu0 %v2498
        %2914 = vmatpush.bf16.msra.mxu0 %v2496
        %2915 = vmatpush.bf16.msra.mxu0 %v2494
        %2916 = vmatpush.bf16.msra.mxu0 %v2492
        %2917 = vmatmul.bf16.gmra.mxu0 %v2095
        %v2918 = vpop.f32.mrf.mxu0
        %v2919 = vadd.f32 %v2890, %v2918
        %v2920 = vpop.f32.mrf.mxu0
        %v2921 = vadd.f32 %v2892, %v2920
        %2922 = vmatmul.bf16.gmra.mxu0 %v2101
        %v2923 = vpop.f32.mrf.mxu0
        %v2924 = vadd.f32 %v2895, %v2923
        %v2925 = vpop.f32.mrf.mxu0
        %v2926 = vadd.f32 %v2897, %v2925
        %2927 = vmatmul.bf16.gmra.mxu0 %v2107
        %v2928 = vpop.f32.mrf.mxu0
        %v2929 = vadd.f32 %v2900, %v2928
        %v2930 = vpop.f32.mrf.mxu0
        %v2931 = vadd.f32 %v2902, %v2930
        %2932 = vmatmul.bf16.gmra.mxu0 %v2113
        %v2933 = vpop.f32.mrf.mxu0
        %v2934 = vadd.f32 %v2905, %v2933
        %v2935 = vpop.f32.mrf.mxu0
        %v2936 = vadd.f32 %v2907, %v2935
        %2937 = vdwg.mxu0
        %2938 = vmatpush.bf16.msra.mxu0 %v2522
        %2939 = vmatpush.bf16.msra.mxu0 %v2520
        %2940 = vmatpush.bf16.msra.mxu0 %v2518
        %2941 = vmatpush.bf16.msra.mxu0 %v2516
        %2942 = vmatpush.bf16.msra.mxu0 %v2514
        %2943 = vmatpush.bf16.msra.mxu0 %v2512
        %2944 = vmatpush.bf16.msra.mxu0 %v2510
        %2945 = vmatpush.bf16.msra.mxu0 %v2508
        %2946 = vmatmul.bf16.gmra.mxu0 %v2096
        %v2947 = vpop.f32.mrf.mxu0
        %v2948 = vadd.f32 %v2919, %v2947
        %v2949 = vpop.f32.mrf.mxu0
        %v2950 = vadd.f32 %v2921, %v2949
        %2951 = vmatmul.bf16.gmra.mxu0 %v2102
        %v2952 = vpop.f32.mrf.mxu0
        %v2953 = vadd.f32 %v2924, %v2952
        %v2954 = vpop.f32.mrf.mxu0
        %v2955 = vadd.f32 %v2926, %v2954
        %2956 = vmatmul.bf16.gmra.mxu0 %v2108
        %v2957 = vpop.f32.mrf.mxu0
        %v2958 = vadd.f32 %v2929, %v2957
        %v2959 = vpop.f32.mrf.mxu0
        %v2960 = vadd.f32 %v2931, %v2959
        %2961 = vmatmul.bf16.gmra.mxu0 %v2114
        %v2962 = vpop.f32.mrf.mxu0
        %v2963 = vadd.f32 %v2934, %v2962
        %v2964 = vpop.f32.mrf.mxu0
        %v2965 = vadd.f32 %v2936, %v2964
        %2966 = vdwg.mxu0
        %v2967 = vunpack.c.l.bf16 %v365
        %v2968 = vunpack.c.h.bf16 %v365
        %v2969 = vunpack.c.l.bf16 %v366
        %v2970 = vunpack.c.h.bf16 %v366
        %v2971 = vunpack.c.l.bf16 %v367
        %v2972 = vunpack.c.h.bf16 %v367
        %v2973 = vunpack.c.l.bf16 %v368
        %v2974 = vunpack.c.h.bf16 %v368
        %v2975 = vunpack.c.l.bf16 %v369
        %v2976 = vunpack.c.h.bf16 %v369
        %v2977 = vunpack.c.l.bf16 %v370
        %v2978 = vunpack.c.h.bf16 %v370
        %v2979 = vunpack.c.l.bf16 %v371
        %v2980 = vunpack.c.h.bf16 %v371
        %v2981 = vunpack.c.l.bf16 %v372
        %v2982 = vunpack.c.h.bf16 %v372
        %v2983 = vld [vmem:[%s5] sm:$0x3]
        %v2985 = vperm.slane %v2983, 0
        %v2986 = vperm.slane %v2983, 1
        %v2989 = vmul.f32 %v2774, %v2985
        %v2990 = vmul.f32 %v2948, %v2986
        %v2991 = vmul.f32 %v2776, %v2985
        %v2992 = vmul.f32 %v2950, %v2986
        %v2993 = vmul.f32 %v2779, %v2985
        %v2994 = vmul.f32 %v2953, %v2986
        %v2995 = vmul.f32 %v2781, %v2985
        %v2996 = vmul.f32 %v2955, %v2986
        %v2997 = vmul.f32 %v2784, %v2985
        %v2998 = vmul.f32 %v2958, %v2986
        %v2999 = vmul.f32 %v2786, %v2985
        %v3000 = vmul.f32 %v2960, %v2986
        %v3001 = vmul.f32 %v2789, %v2985
        %v3002 = vmul.f32 %v2963, %v2986
        %v3003 = vmul.f32 %v2791, %v2985
        %v3004 = vmul.f32 %v2965, %v2986
        %v3005 = vld [vmem:[#allocation11] sm:$0x3]
        %v3007 = vperm.slane %v3005, 0
        %v3008 = vperm.slane %v3005, 1
        %v3011 = vadd.f32 %v2989, %v3007
        %v3012 = vadd.f32 %v2990, %v3008
        %v3013 = vadd.f32 %v2991, %v3007
        %v3014 = vadd.f32 %v2992, %v3008
        %v3015 = vadd.f32 %v2993, %v3007
        %v3016 = vadd.f32 %v2994, %v3008
        %v3017 = vadd.f32 %v2995, %v3007
        %v3018 = vadd.f32 %v2996, %v3008
        %v3019 = vadd.f32 %v2997, %v3007
        %v3020 = vadd.f32 %v2998, %v3008
        %v3021 = vadd.f32 %v2999, %v3007
        %v3022 = vadd.f32 %v3000, %v3008
        %v3023 = vadd.f32 %v3001, %v3007
        %v3024 = vadd.f32 %v3002, %v3008
        %v3025 = vadd.f32 %v3003, %v3007
        %v3026 = vadd.f32 %v3004, %v3008
        %v3027 = vadd.f32 %v3011, %v2967
        %v3028 = vadd.f32 %v3012, %v2968
        %v3029 = vadd.f32 %v3013, %v2969
        %v3030 = vadd.f32 %v3014, %v2970
        %v3031 = vadd.f32 %v3015, %v2971
        %v3032 = vadd.f32 %v3016, %v2972
        %v3033 = vadd.f32 %v3017, %v2973
        %v3034 = vadd.f32 %v3018, %v2974
        %v3035 = vadd.f32 %v3019, %v2975
        %v3036 = vadd.f32 %v3020, %v2976
        %v3037 = vadd.f32 %v3021, %v2977
        %v3038 = vadd.f32 %v3022, %v2978
        %v3039 = vadd.f32 %v3023, %v2979
        %v3040 = vadd.f32 %v3024, %v2980
        %v3041 = vadd.f32 %v3025, %v2981
        %v3042 = vadd.f32 %v3026, %v2982
        %v3043 = vmax.f32 %v3027, 0.0
        %v3044 = vmax.f32 %v3028, 0.0
        %v3045 = vmax.f32 %v3029, 0.0
        %v3046 = vmax.f32 %v3030, 0.0
        %v3047 = vmax.f32 %v3031, 0.0
        %v3048 = vmax.f32 %v3032, 0.0
        %v3049 = vmax.f32 %v3033, 0.0
        %v3050 = vmax.f32 %v3034, 0.0
        %v3051 = vmax.f32 %v3035, 0.0
        %v3052 = vmax.f32 %v3036, 0.0
        %v3053 = vmax.f32 %v3037, 0.0
        %v3054 = vmax.f32 %v3038, 0.0
        %v3055 = vmax.f32 %v3039, 0.0
        %v3056 = vmax.f32 %v3040, 0.0
        %v3057 = vmax.f32 %v3041, 0.0
        %v3058 = vmax.f32 %v3042, 0.0
        %v3059 = vpack.c.bf16 %v3044, %v3043
        %v3060 = vpack.c.bf16 %v3046, %v3045
        %v3061 = vpack.c.bf16 %v3048, %v3047
        %v3062 = vpack.c.bf16 %v3050, %v3049
        %v3063 = vpack.c.bf16 %v3052, %v3051
        %v3064 = vpack.c.bf16 %v3054, %v3053
        %v3065 = vpack.c.bf16 %v3056, %v3055
        %v3066 = vpack.c.bf16 %v3058, %v3057
        %3067 = vst [vmem:[%s361] sm:$0xff] %v3059
        %3068 = vst [vmem:[%s361 + $0x8] sm:$0xff] %v3060
        %3069 = vst [vmem:[%s361 + $0x10] sm:$0xff] %v3061
        %3070 = vst [vmem:[%s361 + $0x18] sm:$0xff] %v3062
        %3071 = vst [vmem:[%s361 + $0x20] sm:$0xff] %v3063
        %3072 = vst [vmem:[%s361 + $0x28] sm:$0xff] %v3064
        %3073 = vst [vmem:[%s361 + $0x30] sm:$0xff] %v3065
        %3074 = vst [vmem:[%s361 + $0x38] sm:$0xff] %v3066
        %s3075 = sand.u32 %s186, 1
        %s3076 = scalar_lea.sflag [#allocation5], %s3075
        %s3077 = sand.u32 %s186, 1
        %s3078 = smul.addr %s3077, 64
        %s3079 = scalar_lea.vmem [#allocation12], %s3078
        // Predicated region
        $region69: #{tpu_custom_call.1} parent=47 // pred_check
          %p3080 = pneg %p196
        $region70: #{tpu_custom_call.1} parent=47 // pred_check_branch
          %3082 = sbr.rel (%p3080) target = $region72
        $region71: #{tpu_custom_call.1} parent=47 // pred_region
          %s3083 = smul.u32 4, %s26
          %3085 = vsyncadd %s3076, 0
          %s3086 = smul.addr %s3083, 4
          %s3087 = smul.addr %s3086, 4
          %s3088 = scalar_lea.hbm %s7, %s3087
          %s3089 = sshll.u32 %s3079, 4
          %s3090 = int_to_ptr.vmem [resolvable:$true] %s3089
          %s3091 = sshll.u32 %s3088, 4
          %s3092 = int_to_ptr.hbm [resolvable:$true] %s3091
          %3097 = dma.vmem_to_hbm [thread:$0]  %s3090, 1024, %s3092, %s3076, 128, 128, 8
        $region72: #{tpu_custom_call.1} parent=47 // pred_fallthru
          _
      $region48: #{tpu_custom_call.1} parent=5 // pred_fallthru
        _
      %p3098 = scmp.le.s32.totalorder 2, %s21
      // Predicated region
      $region73: #{tpu_custom_call.1} parent=5 // pred_check
        %p3099 = pneg %p3098
      $region74: #{tpu_custom_call.1} parent=5 // pred_check_branch
        %3101 = sbr.rel (%p3099) target = $region76
      $region75: #{tpu_custom_call.1} parent=5 // pred_region
        %s3102 = ssub.s32 %s21, 2
        // Predicated region
        $region77: #{tpu_custom_call.1} parent=75 // pred_check
          %p3103 = pneg %p202
        $region78: #{tpu_custom_call.1} parent=75 // pred_check_branch
          %3105 = sbr.rel (%p3103) target = $region80
        $region79: #{tpu_custom_call.1} parent=75 // pred_region
          %s3106 = sand.u32 %s187, 1
          %s3107 = scalar_lea.sflag [#allocation5], %s3106
          %s3108 = sand.u32 %s187, 1
          %s3109 = smul.addr %s3108, 64
          %s3110 = scalar_lea.vmem [#allocation12], %s3109
          %3112 = dma.done %s3107, 1024
        $region80: #{tpu_custom_call.1} parent=75 // pred_fallthru
          _
      $region76: #{tpu_custom_call.1} parent=5 // pred_fallthru
        _
    $region6: #{tpu_custom_call.1} parent=1 // loop_footer
      %s25 = sadd.s32 1, %s21
    $region7: #{tpu_custom_call.1} parent=1 // loop_footer_branch
      %20 = sbr.rel target = $region3
    $region8: #{tpu_custom_call.1} parent=1 // loop_exit
      _
    %3113 = vsyncpa [#allocation4], 1
    %s3114 = scalar_lea.sflag [#allocation4], 1
    %3115 = vsyncpa %s3114, 1
    %3116 = vsyncpa [#allocation7], 1
    %3117 = vsyncpa [#allocation10], 1
    %3118 = vsyncpa [#allocation5], 1
    %s3119 = scalar_lea.sflag [#allocation5], 1
    %3120 = vsyncpa %s3119, 1

</llo_original>
